<compile_context>
chip_gen: v7x
topology: tpu7x:2x2x1
jax: 0.10.0
libtpu: 0.0.40
codegen_flags: <defaults>
</compile_context>

<pallas_src>
import functools
import math

import jax
import jax.numpy as jnp
from jax.experimental import pallas as pl
from jax.experimental.pallas import tpu as pltpu


def _pick_tile(total, cap):
    """Largest 128-multiple <= cap that divides `total`, else the full extent."""
    if total <= cap:
        return total
    t = (cap // 128) * 128
    while t >= 128:
        if total % t == 0:
            return t
        t -= 128
    return total


def _pick_t_chunk(T, HW, C, byte_cap=4 << 20):
    """Largest divisor tc of T such that tc*HW is a 128-multiple (or tc == T,
    i.e. the full extent) and the per-step input tile stays under byte_cap."""
    valid = [tc for tc in range(1, T + 1)
             if T % tc == 0 and ((tc * HW) % 128 == 0 or tc == T)]
    fitting = [tc for tc in valid if tc * C * HW * 4 <= byte_cap]
    return max(fitting) if fitting else min(valid)


# ---------------------------------------------------------------------------
# Kernel 1: fused key+value 1x1 conv over space_time_mem.
# Outputs are written directly in the downstream layouts:
#   Q: [N, C_qk, L1]  (L1 = T*H*W, t-major)      V: [N, C, L1]
# ---------------------------------------------------------------------------
def _mem_proj_kernel(x_ref, wq_ref, bq_ref, wv_ref, bv_ref, oq_ref, ov_ref,
                     *, t_chunk, hw):
    for t in range(t_chunk):
        x = x_ref[t, 0].astype(jnp.bfloat16)                        # (C, HW)
        q = jnp.dot(wq_ref[...], x, preferred_element_type=jnp.float32) + bq_ref[...]
        v = jnp.dot(wv_ref[...], x, preferred_element_type=jnp.float32) + bv_ref[...]
        oq_ref[0, :, t * hw:(t + 1) * hw] = q.astype(oq_ref.dtype)
        ov_ref[0, :, t * hw:(t + 1) * hw] = v.astype(ov_ref.dtype)


def mem_projections(space_time_mem, wq, bq, wv, bv):
    """space_time_mem [T,N,C,H,W] f32 -> (q [N,C_qk,L1], v [N,C,L1]) bf16."""
    T, N, C, H1, W1 = space_time_mem.shape
    HW = H1 * W1
    L1 = T * HW
    C_qk = wq.shape[0]
    x = space_time_mem.reshape(T, N, C, HW)
    t_chunk = _pick_t_chunk(T, HW, C)
    kernel = functools.partial(_mem_proj_kernel, t_chunk=t_chunk, hw=HW)

    oq, ov = pl.pallas_call(
        kernel,
        out_shape=(
            jax.ShapeDtypeStruct((N, C_qk, L1), jnp.bfloat16),
            jax.ShapeDtypeStruct((N, C, L1), jnp.bfloat16),
        ),
        grid_spec=pltpu.PrefetchScalarGridSpec(
            num_scalar_prefetch=0,
            grid=(N, T // t_chunk),
            in_specs=[
                pl.BlockSpec((t_chunk, 1, C, HW), lambda n, tb: (tb, n, 0, 0)),
                pl.BlockSpec((C_qk, C), lambda n, tb: (0, 0)),
                pl.BlockSpec((C_qk, 1), lambda n, tb: (0, 0)),
                pl.BlockSpec((C, C), lambda n, tb: (0, 0)),
                pl.BlockSpec((C, 1), lambda n, tb: (0, 0)),
            ],
            out_specs=(
                pl.BlockSpec((1, C_qk, t_chunk * HW), lambda n, tb: (n, 0, tb)),
                pl.BlockSpec((1, C, t_chunk * HW), lambda n, tb: (n, 0, tb)),
            ),
        ),
        compiler_params=pltpu.CompilerParams(
            dimension_semantics=("parallel", "parallel"),
            vmem_limit_bytes=32 * 1024 * 1024,
        ),
    )(x, wq.astype(jnp.bfloat16), bq.reshape(C_qk, 1),
      wv.astype(jnp.bfloat16), bv.reshape(C, 1))
    return oq, ov


# ---------------------------------------------------------------------------
# Kernel 2: key 1x1 conv over features2 -> [N, C_qk, L2]
# ---------------------------------------------------------------------------
def _key_proj_kernel(x_ref, w_ref, b_ref, o_ref):
    x = x_ref[0].astype(jnp.bfloat16)                               # (C, tl2)
    o_ref[0] = (jnp.dot(w_ref[...], x, preferred_element_type=jnp.float32)
                + b_ref[...]).astype(o_ref.dtype)


def key_projection(features2, w, b, tl2_cap=2048):
    N, C, H2, W2 = features2.shape
    L2 = H2 * W2
    C_qk = w.shape[0]
    tl2 = _pick_tile(L2, tl2_cap)
    x = features2.reshape(N, C, L2)
    return pl.pallas_call(
        _key_proj_kernel,
        out_shape=jax.ShapeDtypeStruct((N, C_qk, L2), jnp.bfloat16),
        grid_spec=pltpu.PrefetchScalarGridSpec(
            num_scalar_prefetch=0,
            grid=(N, L2 // tl2),      # second parallel axis feeds both v7x TCs
            in_specs=[
                pl.BlockSpec((1, C, tl2), lambda n, j: (n, 0, j)),
                pl.BlockSpec((C_qk, C), lambda n, j: (0, 0)),
                pl.BlockSpec((C_qk, 1), lambda n, j: (0, 0)),
            ],
            out_specs=pl.BlockSpec((1, C_qk, tl2), lambda n, j: (n, 0, j)),
        ),
        compiler_params=pltpu.CompilerParams(
            dimension_semantics=("parallel", "parallel"),
            vmem_limit_bytes=32 * 1024 * 1024,
        ),
    )(x, w.astype(jnp.bfloat16), b.reshape(C_qk, 1))


# ---------------------------------------------------------------------------
# Kernel 3: fused softmax(L1) + V @ R + features2 (flash-style, online softmax)
# relation_percent == 1.0 path: R never materializes in HBM.
# ---------------------------------------------------------------------------
def _fused_softmax_augment_kernel(q_ref, k_ref, v_ref, f2_ref, o_ref,
                                  m_scr, l_scr, acc_scr, *, tl1, v_resident):
    li = pl.program_id(2)

    @pl.when(li == 0)
    def _init():
        m_scr[...] = jnp.full(m_scr.shape, -jnp.inf, dtype=m_scr.dtype)
        l_scr[...] = jnp.zeros(l_scr.shape, dtype=l_scr.dtype)
        acc_scr[...] = jnp.zeros(acc_scr.shape, dtype=acc_scr.dtype)

    # Q stays channel-major: s[l1, l2] = sum_c q[c, l1] * k[c, l2].
    # Score matmul has K = C_qk (tiny), so it runs in f32; scale is pre-folded.
    q = q_ref[0].astype(jnp.float32)                                # (C_qk, tl1)
    k = k_ref[0].astype(jnp.float32)                                # (C_qk, tl2)
    s = jax.lax.dot_general(q, k, (((0,), (0,)), ((), ())),
                            preferred_element_type=jnp.float32)     # (tl1, tl2)

    m_prev = m_scr[...]
    m_new = jnp.maximum(m_prev, jnp.max(s, axis=0, keepdims=True))
    alpha = jnp.exp(m_prev - m_new)                                 # (1, tl2)
    p = jnp.exp(s - m_new)                                          # (tl1, tl2)
    l_scr[...] = alpha * l_scr[...] + jnp.sum(p, axis=0, keepdims=True)

    if v_resident:
        start = pl.multiple_of(li * tl1, tl1)
        v_blk = v_ref[0, :, pl.ds(start, tl1)]                      # (C, tl1) bf16
    else:
        v_blk = v_ref[0]                                            # (C, tl1) bf16
    acc_scr[...] = alpha * acc_scr[...] + jnp.dot(
        v_blk, p.astype(jnp.bfloat16), preferred_element_type=jnp.float32)
    m_scr[...] = m_new

    @pl.when(li == pl.num_programs(2) - 1)
    def _finalize():
        inv_l = pl.reciprocal(l_scr[...], approx=True)
        o_ref[0] = acc_scr[...] * inv_l + f2_ref[0]


def fused_softmax_augment(q, k, v, f2_mat, tl1_cap=256, tl2_cap=1024,
                          vmem_limit=48 * 1024 * 1024):
    """q [N,C_qk,L1] bf16, k [N,C_qk,L2] bf16, v [N,C,L1] bf16, f2 [N,C,L2] f32."""
    N, C_qk, L1 = q.shape
    _, C, L2 = f2_mat.shape
    tl1 = _pick_tile(L1, tl1_cap)   # exact divisor: ragged L1 would corrupt softmax
    tl2 = _pick_tile(L2, tl2_cap)

    # Keep the whole V[n] resident in VMEM when small: no (L2/tl2)x re-streaming.
    v_resident = (C * L1 * 2) <= (4 << 20)
    v_bytes = C * L1 * 2 if v_resident else C * tl1 * 2

    # Loud failure instead of a silent OOM from a full-extent fallback tile.
    est = (2 * (C_qk * tl1 * 2 + C_qk * tl2 * 2 + 2 * C * tl2 * 4 + v_bytes)
           + (C * tl2 + 2 * tl2) * 4 + 4 * tl1 * tl2)
    if est > vmem_limit:
        raise ValueError(
            f"fused_softmax_augment tiles (tl1={tl1}, tl2={tl2}) need ~{est} B VMEM"
            f" > {vmem_limit} B; use L1/L2 with 128-multiple divisors or smaller caps.")

    if v_resident:
        v_spec = pl.BlockSpec((1, C, L1), lambda n, mi, li: (n, 0, 0))
    else:
        v_spec = pl.BlockSpec((1, C, tl1), lambda n, mi, li: (n, 0, li))
    kernel = functools.partial(_fused_softmax_augment_kernel,
                               tl1=tl1, v_resident=v_resident)

    return pl.pallas_call(
        kernel,
        out_shape=jax.ShapeDtypeStruct((N, C, L2), jnp.float32),
        grid_spec=pltpu.PrefetchScalarGridSpec(
            num_scalar_prefetch=0,
            grid=(N, L2 // tl2, L1 // tl1),          # reduction axis (L1) last
            in_specs=[
                pl.BlockSpec((1, C_qk, tl1), lambda n, mi, li: (n, 0, li)),
                pl.BlockSpec((1, C_qk, tl2), lambda n, mi, li: (n, 0, mi)),
                v_spec,
                pl.BlockSpec((1, C, tl2), lambda n, mi, li: (n, 0, mi)),
            ],
            out_specs=pl.BlockSpec((1, C, tl2), lambda n, mi, li: (n, 0, mi)),
            scratch_shapes=[
                pltpu.VMEM((1, tl2), jnp.float32),   # running max
                pltpu.VMEM((1, tl2), jnp.float32),   # running denom
                pltpu.VMEM((C, tl2), jnp.float32),   # output accumulator
            ],
        ),
        compiler_params=pltpu.CompilerParams(
            dimension_semantics=("parallel", "parallel", "arbitrary"),
            vmem_limit_bytes=vmem_limit,
        ),
    )(q, k, v, f2_mat)


# ---------------------------------------------------------------------------
# Kernels 4/5: relation matrix + augment (relation_percent < 1.0 fallback path)
# ---------------------------------------------------------------------------
def _relation_kernel(q_ref, k_ref, r_ref):
    q = q_ref[0].astype(jnp.float32)                                # (C_qk, L1)
    k = k_ref[0].astype(jnp.float32)                                # (C_qk, tl2)
    s = jax.lax.dot_general(q, k, (((0,), (0,)), ((), ())),
                            preferred_element_type=jnp.float32)     # (L1, tl2)
    m = jnp.max(s, axis=0, keepdims=True)
    e = jnp.exp(s - m)
    r = e * pl.reciprocal(jnp.sum(e, axis=0, keepdims=True), approx=True)
    r_ref[0] = r.astype(r_ref.dtype)


def relation_softmax(q, k, tl2_cap=512):
    # TODO(synk): tile L1 (two-pass / online softmax) for very large L1; the
    # default relation_percent==1.0 path never materializes R at all.
    N, C_qk, L1 = q.shape
    L2 = k.shape[2]
    tl2 = _pick_tile(L2, tl2_cap)
    return pl.pallas_call(
        _relation_kernel,
        out_shape=jax.ShapeDtypeStruct((N, L1, L2), jnp.bfloat16),   # bf16: half HBM
        grid_spec=pltpu.PrefetchScalarGridSpec(
            num_scalar_prefetch=0,
            grid=(N, L2 // tl2),
            in_specs=[
                pl.BlockSpec((1, C_qk, L1), lambda n, mi: (n, 0, 0)),
                pl.BlockSpec((1, C_qk, tl2), lambda n, mi: (n, 0, mi)),
            ],
            out_specs=pl.BlockSpec((1, L1, tl2), lambda n, mi: (n, 0, mi)),
        ),
        compiler_params=pltpu.CompilerParams(
            dimension_semantics=("parallel", "parallel"),
            vmem_limit_bytes=32 * 1024 * 1024,
        ),
    )(q, k)


def _augment_kernel(v_ref, r_ref, f_ref, o_ref):
    o_ref[0] = (jnp.dot(v_ref[0], r_ref[0], preferred_element_type=jnp.float32)
                + f_ref[0])


def augment(v_sel, r_sel, f2_mat, tl2_cap=512):
    N, C, Lk = v_sel.shape
    L2 = r_sel.shape[2]
    tl2 = _pick_tile(L2, tl2_cap)
    return pl.pallas_call(
        _augment_kernel,
        out_shape=jax.ShapeDtypeStruct((N, C, L2), jnp.float32),
        grid_spec=pltpu.PrefetchScalarGridSpec(
            num_scalar_prefetch=0,
            grid=(N, L2 // tl2),
            in_specs=[
                pl.BlockSpec((1, C, Lk), lambda n, mi: (n, 0, 0)),
                pl.BlockSpec((1, Lk, tl2), lambda n, mi: (n, 0, mi)),
                pl.BlockSpec((1, C, tl2), lambda n, mi: (n, 0, mi)),
            ],
            out_specs=pl.BlockSpec((1, C, tl2), lambda n, mi: (n, 0, mi)),
        ),
        compiler_params=pltpu.CompilerParams(
            dimension_semantics=("parallel", "parallel"),
            vmem_limit_bytes=32 * 1024 * 1024,
        ),
    )(v_sel, r_sel, f2_mat)


# ---------------------------------------------------------------------------
# Parameter init (deterministic, mirrors the module's init_weights)
# ---------------------------------------------------------------------------
def init_params(key, C_in, C_qk):
    def xavier_uniform(k, c_out, c_in):
        bound = math.sqrt(6.0 / (c_in + c_out))
        return jax.random.uniform(
            k, (c_out, c_in), dtype=jnp.float32, minval=-bound, maxval=bound)

    k1, k2 = jax.random.split(key)
    w_key = xavier_uniform(k1, C_qk, C_in)          # [C_qk, C_in] (1x1 squeezed)
    b_key = jnp.zeros((C_qk,), jnp.float32)
    w_val = xavier_uniform(k2, C_in, C_in)          # [C_in, C_in]
    b_val = jnp.zeros((C_in,), jnp.float32)
    return w_key, b_key, w_val, b_val


# ---------------------------------------------------------------------------
# Forward (glue in JAX, hot paths in Pallas)
# ---------------------------------------------------------------------------
def pointwise_graph_nn(space_time_mem, features2, params, relation_percent=1.0):
    T, N, C, H1, W1 = space_time_mem.shape
    _, _, H2, W2 = features2.shape
    w_key, b_key, w_val, b_val = params
    C_qk = w_key.shape[0]
    L1 = T * H1 * W1
    L2 = H2 * W2
    scale = 1.0 / math.sqrt(C_qk)

    # Fold the 1/sqrt(C_qk) score scale into the query projection (Q path only).
    q, v = mem_projections(space_time_mem, w_key * scale, b_key * scale,
                           w_val, b_val)                         # bf16, final layouts
    k = key_projection(features2, w_key, b_key)                  # [N, C_qk, L2] bf16
    f2_mat = features2.reshape(N, C, L2)                         # f32

    if relation_percent >= 1.0:
        # argsort + index_select over ALL indices is a pure permutation of the
        # contraction axis: V[:, :, perm] @ R[:, perm, :] == V @ R, so skip it
        # and never materialize R in HBM.
        out = fused_softmax_augment(q, k, v, f2_mat)
    else:
        R = relation_softmax(q, k)                               # [N, L1, L2] bf16
        # TODO(synk): ranking + gather stay in plain JAX; a scalar-prefetch
        # indexed index_map in augment() would avoid materializing the gathered
        # copies (R_sel, V_sel) through HBM.
        rel_sum = jnp.sum(R.astype(jnp.float32), axis=(0, 2))
        kept = max(1, int(L1 * relation_percent))                # guard against 0
        indices = jnp.argsort(-rel_sum)[:kept]
        R_sel = jnp.take(R, indices, axis=1)                     # [N, Lk, L2]
        V_sel = jnp.take(v, indices, axis=2)                     # [N, C, Lk]
        out = augment(V_sel, R_sel, f2_mat)
    return out.reshape(N, C, H2, W2)


# ---------------------------------------------------------------------------
# Pure-JAX f32 reference (mirrors the PyTorch code path) for sanity checking
# ---------------------------------------------------------------------------
def reference(space_time_mem, features2, params, relation_percent=1.0):
    T, N, C, H1, W1 = space_time_mem.shape
    _, _, H2, W2 = features2.shape
    w_key, b_key, w_val, b_val = params
    C_qk = w_key.shape[0]

    def conv(x, w, b):  # x: [B, C, H, W], w: [Co, Ci]
        return jnp.einsum("bchw,oc->bohw", x, w) + b[None, :, None, None]

    mem4 = space_time_mem.reshape(T * N, C, H1, W1)
    q1 = conv(mem4, w_key, b_key)
    k2 = conv(features2, w_key, b_key)
    v1 = conv(mem4, w_val, b_val)
    q5 = q1.reshape(T, N, C_qk, H1, W1).transpose(1, 2, 0, 3, 4)
    v5 = v1.reshape(T, N, C, H1, W1).transpose(1, 2, 0, 3, 4)
    m1 = q5.reshape(N, C_qk, T * H1 * W1).transpose(0, 2, 1)
    m2 = k2.reshape(N, C_qk, H2 * W2)
    rel = jnp.einsum("nlc,ncm->nlm", m1, m2) / math.sqrt(C_qk)
    rel = jax.nn.softmax(rel, axis=1)
    v_mat = v5.reshape(N, C, T * H1 * W1)
    rel_sum = rel.sum(axis=(0, 2))
    indices = jnp.argsort(-rel_sum)
    if relation_percent < 1.0:
        indices = indices[: max(1, int(T * H1 * W1 * relation_percent))]
    rel = jnp.take(rel, indices, axis=1)
    v_mat = jnp.take(v_mat, indices, axis=2)
    aug = jnp.einsum("ncl,nlm->ncm", v_mat, rel).reshape(features2.shape)
    return aug + features2


if __name__ == "__main__":
    # Small shapes consistent with the module's forward signature.
    T, N, C, H1, W1 = 4, 2, 32, 8, 8
    H2, W2 = 8, 8
    C_qk = C // 8

    key = jax.random.PRNGKey(0)
    k_mem, k_f2, k_params = jax.random.split(key, 3)
    space_time_mem = jax.random.normal(k_mem, (T, N, C, H1, W1), dtype=jnp.float32)
    features2 = jax.random.normal(k_f2, (N, C, H2, W2), dtype=jnp.float32)
    params = init_params(k_params, C, C_qk)

    out = jax.block_until_ready(
        pointwise_graph_nn(space_time_mem, features2, params, relation_percent=1.0))
    ref = jax.block_until_ready(
        reference(space_time_mem, features2, params, relation_percent=1.0))
    assert out.shape == (N, C, H2, W2)
    # bf16 MXU operands + approx reciprocal -> correspondingly relaxed tolerance.
    assert jnp.allclose(out, ref, rtol=5e-2, atol=5e-2), "mismatch vs JAX reference"

    # Smoke-test the relation_percent < 1.0 (ranked / gathered) path: argsort
    # tie-breaking under bf16 vs f32 can legally pick different indices, so we
    # only check shape / finiteness here.
    out_half = jax.block_until_ready(
        pointwise_graph_nn(space_time_mem, features2, params, relation_percent=0.5))
    assert out_half.shape == (N, C, H2, W2)
    assert bool(jnp.all(jnp.isfinite(out_half)))

    print("KERNEL_OK")
</pallas_src>

<mosaic_0001>
module attributes {stable_mosaic.version = 11 : i64} {
  func.func @_mem_proj_kernel(%arg0: i32, %arg1: i32, %arg2: memref<4x1x32x64xf32, #tpu.memory_space<vmem>>, %arg3: memref<4x32xbf16, #tpu.memory_space<vmem>>, %arg4: memref<4x1xf32, #tpu.memory_space<vmem>>, %arg5: memref<32x32xbf16, #tpu.memory_space<vmem>>, %arg6: memref<32x1xf32, #tpu.memory_space<vmem>>, %arg7: memref<1x4x256xbf16, #tpu.memory_space<vmem>>, %arg8: memref<1x32x256xbf16, #tpu.memory_space<vmem>>) attributes {dimension_semantics = [#tpu.dimension_semantics<parallel>, #tpu.dimension_semantics<parallel>], iteration_bounds = array<i64: 2, 1>, scalar_prefetch = 0 : i64, scratch_operands = 0 : i64, tpu.core_type = #tpu.core_type<tc>, window_params = [{transform_indices = @transform_0, window_bounds = array<i64: 4, 1, 32, 64>}, {pipeline_mode = #tpu.pipeline_mode<synchronous>, transform_indices = @transform_1, window_bounds = array<i64: 4, 32>}, {pipeline_mode = #tpu.pipeline_mode<synchronous>, transform_indices = @transform_2, window_bounds = array<i64: 4, 1>}, {pipeline_mode = #tpu.pipeline_mode<synchronous>, transform_indices = @transform_3, window_bounds = array<i64: 32, 32>}, {pipeline_mode = #tpu.pipeline_mode<synchronous>, transform_indices = @transform_4, window_bounds = array<i64: 32, 1>}, {transform_indices = @transform_5, window_bounds = array<i64: 1, 4, 256>}, {transform_indices = @transform_6, window_bounds = array<i64: 1, 32, 256>}]} {
    %c0 = arith.constant 0 : index
    %c0_0 = arith.constant 0 : index
    %c0_1 = arith.constant 0 : index
    %c0_2 = arith.constant 0 : index
    %0 = vector.load %arg2[%c0, %c0_0, %c0_1, %c0_2] : memref<4x1x32x64xf32, #tpu.memory_space<vmem>>, vector<1x1x32x64xf32>
    %1 = vector.shape_cast %0 : vector<1x1x32x64xf32> to vector<32x64xf32>
    %2 = arith.truncf %1 : vector<32x64xf32> to vector<32x64xbf16>
    %c0_3 = arith.constant 0 : index
    %c0_4 = arith.constant 0 : index
    %3 = vector.load %arg3[%c0_3, %c0_4] : memref<4x32xbf16, #tpu.memory_space<vmem>>, vector<4x32xbf16>
    %cst = arith.constant dense<0.000000e+00> : vector<4x64xf32>
    %4 = tpu.matmul %3, %2, %cst {dimension_numbers = #tpu.dot_dimension_numbers<[1], [0], [0], [1], [0, 0, 1, 1], [], []>} : vector<4x32xbf16>, vector<32x64xbf16>, vector<4x64xf32> -> vector<4x64xf32>
    %c0_5 = arith.constant 0 : index
    %c0_6 = arith.constant 0 : index
    %5 = vector.load %arg4[%c0_5, %c0_6] : memref<4x1xf32, #tpu.memory_space<vmem>>, vector<4x1xf32>
    %6 = vector.broadcast %5 : vector<4x1xf32> to vector<4x64xf32>
    %7 = arith.addf %4, %6 : vector<4x64xf32>
    %c0_7 = arith.constant 0 : index
    %c0_8 = arith.constant 0 : index
    %8 = vector.load %arg5[%c0_7, %c0_8] : memref<32x32xbf16, #tpu.memory_space<vmem>>, vector<32x32xbf16>
    %cst_9 = arith.constant dense<0.000000e+00> : vector<32x64xf32>
    %9 = tpu.matmul %8, %2, %cst_9 {dimension_numbers = #tpu.dot_dimension_numbers<[1], [0], [0], [1], [0, 0, 1, 1], [], []>} : vector<32x32xbf16>, vector<32x64xbf16>, vector<32x64xf32> -> vector<32x64xf32>
    %c0_10 = arith.constant 0 : index
    %c0_11 = arith.constant 0 : index
    %10 = vector.load %arg6[%c0_10, %c0_11] : memref<32x1xf32, #tpu.memory_space<vmem>>, vector<32x1xf32>
    %11 = vector.broadcast %10 : vector<32x1xf32> to vector<32x64xf32>
    %12 = arith.addf %9, %11 : vector<32x64xf32>
    %13 = arith.truncf %7 : vector<4x64xf32> to vector<4x64xbf16>
    %c0_12 = arith.constant 0 : index
    %c0_13 = arith.constant 0 : index
    %c0_14 = arith.constant 0 : index
    %14 = vector.load %arg7[%c0_12, %c0_13, %c0_14] : memref<1x4x256xbf16, #tpu.memory_space<vmem>>, vector<1x4x64xbf16>
    %15 = vector.shape_cast %14 : vector<1x4x64xbf16> to vector<4x64xbf16>
    %16 = vector.shape_cast %13 : vector<4x64xbf16> to vector<1x4x64xbf16>
    tpu.vector_store %arg7[%c0_12, %c0_13, %c0_14], %16 {strides = array<i32>} : memref<1x4x256xbf16, #tpu.memory_space<vmem>>, vector<1x4x64xbf16>,
    %17 = arith.truncf %12 : vector<32x64xf32> to vector<32x64xbf16>
    %c0_15 = arith.constant 0 : index
    %c0_16 = arith.constant 0 : index
    %c0_17 = arith.constant 0 : index
    %18 = vector.load %arg8[%c0_15, %c0_16, %c0_17] : memref<1x32x256xbf16, #tpu.memory_space<vmem>>, vector<1x32x64xbf16>
    %19 = vector.shape_cast %18 : vector<1x32x64xbf16> to vector<32x64xbf16>
    %20 = vector.shape_cast %17 : vector<32x64xbf16> to vector<1x32x64xbf16>
    tpu.vector_store %arg8[%c0_15, %c0_16, %c0_17], %20 {strides = array<i32>} : memref<1x32x256xbf16, #tpu.memory_space<vmem>>, vector<1x32x64xbf16>,
    %c1 = arith.constant 1 : index
    %c0_18 = arith.constant 0 : index
    %c0_19 = arith.constant 0 : index
    %c0_20 = arith.constant 0 : index
    %21 = vector.load %arg2[%c1, %c0_18, %c0_19, %c0_20] : memref<4x1x32x64xf32, #tpu.memory_space<vmem>>, vector<1x1x32x64xf32>
    %22 = vector.shape_cast %21 : vector<1x1x32x64xf32> to vector<32x64xf32>
    %23 = arith.truncf %22 : vector<32x64xf32> to vector<32x64xbf16>
    %c0_21 = arith.constant 0 : index
    %c0_22 = arith.constant 0 : index
    %24 = vector.load %arg3[%c0_21, %c0_22] : memref<4x32xbf16, #tpu.memory_space<vmem>>, vector<4x32xbf16>
    %cst_23 = arith.constant dense<0.000000e+00> : vector<4x64xf32>
    %25 = tpu.matmul %24, %23, %cst_23 {dimension_numbers = #tpu.dot_dimension_numbers<[1], [0], [0], [1], [0, 0, 1, 1], [], []>} : vector<4x32xbf16>, vector<32x64xbf16>, vector<4x64xf32> -> vector<4x64xf32>
    %c0_24 = arith.constant 0 : index
    %c0_25 = arith.constant 0 : index
    %26 = vector.load %arg4[%c0_24, %c0_25] : memref<4x1xf32, #tpu.memory_space<vmem>>, vector<4x1xf32>
    %27 = vector.broadcast %26 : vector<4x1xf32> to vector<4x64xf32>
    %28 = arith.addf %25, %27 : vector<4x64xf32>
    %c0_26 = arith.constant 0 : index
    %c0_27 = arith.constant 0 : index
    %29 = vector.load %arg5[%c0_26, %c0_27] : memref<32x32xbf16, #tpu.memory_space<vmem>>, vector<32x32xbf16>
    %cst_28 = arith.constant dense<0.000000e+00> : vector<32x64xf32>
    %30 = tpu.matmul %29, %23, %cst_28 {dimension_numbers = #tpu.dot_dimension_numbers<[1], [0], [0], [1], [0, 0, 1, 1], [], []>} : vector<32x32xbf16>, vector<32x64xbf16>, vector<32x64xf32> -> vector<32x64xf32>
    %c0_29 = arith.constant 0 : index
    %c0_30 = arith.constant 0 : index
    %31 = vector.load %arg6[%c0_29, %c0_30] : memref<32x1xf32, #tpu.memory_space<vmem>>, vector<32x1xf32>
    %32 = vector.broadcast %31 : vector<32x1xf32> to vector<32x64xf32>
    %33 = arith.addf %30, %32 : vector<32x64xf32>
    %34 = arith.truncf %28 : vector<4x64xf32> to vector<4x64xbf16>
    %c0_31 = arith.constant 0 : index
    %c0_32 = arith.constant 0 : index
    %c64 = arith.constant 64 : index
    %35 = vector.load %arg7[%c0_31, %c0_32, %c64] : memref<1x4x256xbf16, #tpu.memory_space<vmem>>, vector<1x4x64xbf16>
    %36 = vector.shape_cast %35 : vector<1x4x64xbf16> to vector<4x64xbf16>
    %37 = vector.shape_cast %34 : vector<4x64xbf16> to vector<1x4x64xbf16>
    tpu.vector_store %arg7[%c0_31, %c0_32, %c64], %37 {strides = array<i32>} : memref<1x4x256xbf16, #tpu.memory_space<vmem>>, vector<1x4x64xbf16>,
    %38 = arith.truncf %33 : vector<32x64xf32> to vector<32x64xbf16>
    %c0_33 = arith.constant 0 : index
    %c0_34 = arith.constant 0 : index
    %c64_35 = arith.constant 64 : index
    %39 = vector.load %arg8[%c0_33, %c0_34, %c64_35] : memref<1x32x256xbf16, #tpu.memory_space<vmem>>, vector<1x32x64xbf16>
    %40 = vector.shape_cast %39 : vector<1x32x64xbf16> to vector<32x64xbf16>
    %41 = vector.shape_cast %38 : vector<32x64xbf16> to vector<1x32x64xbf16>
    tpu.vector_store %arg8[%c0_33, %c0_34, %c64_35], %41 {strides = array<i32>} : memref<1x32x256xbf16, #tpu.memory_space<vmem>>, vector<1x32x64xbf16>,
    %c2 = arith.constant 2 : index
    %c0_36 = arith.constant 0 : index
    %c0_37 = arith.constant 0 : index
    %c0_38 = arith.constant 0 : index
    %42 = vector.load %arg2[%c2, %c0_36, %c0_37, %c0_38] : memref<4x1x32x64xf32, #tpu.memory_space<vmem>>, vector<1x1x32x64xf32>
    %43 = vector.shape_cast %42 : vector<1x1x32x64xf32> to vector<32x64xf32>
    %44 = arith.truncf %43 : vector<32x64xf32> to vector<32x64xbf16>
    %c0_39 = arith.constant 0 : index
    %c0_40 = arith.constant 0 : index
    %45 = vector.load %arg3[%c0_39, %c0_40] : memref<4x32xbf16, #tpu.memory_space<vmem>>, vector<4x32xbf16>
    %cst_41 = arith.constant dense<0.000000e+00> : vector<4x64xf32>
    %46 = tpu.matmul %45, %44, %cst_41 {dimension_numbers = #tpu.dot_dimension_numbers<[1], [0], [0], [1], [0, 0, 1, 1], [], []>} : vector<4x32xbf16>, vector<32x64xbf16>, vector<4x64xf32> -> vector<4x64xf32>
    %c0_42 = arith.constant 0 : index
    %c0_43 = arith.constant 0 : index
    %47 = vector.load %arg4[%c0_42, %c0_43] : memref<4x1xf32, #tpu.memory_space<vmem>>, vector<4x1xf32>
    %48 = vector.broadcast %47 : vector<4x1xf32> to vector<4x64xf32>
    %49 = arith.addf %46, %48 : vector<4x64xf32>
    %c0_44 = arith.constant 0 : index
    %c0_45 = arith.constant 0 : index
    %50 = vector.load %arg5[%c0_44, %c0_45] : memref<32x32xbf16, #tpu.memory_space<vmem>>, vector<32x32xbf16>
    %cst_46 = arith.constant dense<0.000000e+00> : vector<32x64xf32>
    %51 = tpu.matmul %50, %44, %cst_46 {dimension_numbers = #tpu.dot_dimension_numbers<[1], [0], [0], [1], [0, 0, 1, 1], [], []>} : vector<32x32xbf16>, vector<32x64xbf16>, vector<32x64xf32> -> vector<32x64xf32>
    %c0_47 = arith.constant 0 : index
    %c0_48 = arith.constant 0 : index
    %52 = vector.load %arg6[%c0_47, %c0_48] : memref<32x1xf32, #tpu.memory_space<vmem>>, vector<32x1xf32>
    %53 = vector.broadcast %52 : vector<32x1xf32> to vector<32x64xf32>
    %54 = arith.addf %51, %53 : vector<32x64xf32>
    %55 = arith.truncf %49 : vector<4x64xf32> to vector<4x64xbf16>
    %c0_49 = arith.constant 0 : index
    %c0_50 = arith.constant 0 : index
    %c128 = arith.constant 128 : index
    %56 = vector.load %arg7[%c0_49, %c0_50, %c128] : memref<1x4x256xbf16, #tpu.memory_space<vmem>>, vector<1x4x64xbf16>
    %57 = vector.shape_cast %56 : vector<1x4x64xbf16> to vector<4x64xbf16>
    %58 = vector.shape_cast %55 : vector<4x64xbf16> to vector<1x4x64xbf16>
    tpu.vector_store %arg7[%c0_49, %c0_50, %c128], %58 {strides = array<i32>} : memref<1x4x256xbf16, #tpu.memory_space<vmem>>, vector<1x4x64xbf16>,
    %59 = arith.truncf %54 : vector<32x64xf32> to vector<32x64xbf16>
    %c0_51 = arith.constant 0 : index
    %c0_52 = arith.constant 0 : index
    %c128_53 = arith.constant 128 : index
    %60 = vector.load %arg8[%c0_51, %c0_52, %c128_53] : memref<1x32x256xbf16, #tpu.memory_space<vmem>>, vector<1x32x64xbf16>
    %61 = vector.shape_cast %60 : vector<1x32x64xbf16> to vector<32x64xbf16>
    %62 = vector.shape_cast %59 : vector<32x64xbf16> to vector<1x32x64xbf16>
    tpu.vector_store %arg8[%c0_51, %c0_52, %c128_53], %62 {strides = array<i32>} : memref<1x32x256xbf16, #tpu.memory_space<vmem>>, vector<1x32x64xbf16>,
    %c3 = arith.constant 3 : index
    %c0_54 = arith.constant 0 : index
    %c0_55 = arith.constant 0 : index
    %c0_56 = arith.constant 0 : index
    %63 = vector.load %arg2[%c3, %c0_54, %c0_55, %c0_56] : memref<4x1x32x64xf32, #tpu.memory_space<vmem>>, vector<1x1x32x64xf32>
    %64 = vector.shape_cast %63 : vector<1x1x32x64xf32> to vector<32x64xf32>
    %65 = arith.truncf %64 : vector<32x64xf32> to vector<32x64xbf16>
    %c0_57 = arith.constant 0 : index
    %c0_58 = arith.constant 0 : index
    %66 = vector.load %arg3[%c0_57, %c0_58] : memref<4x32xbf16, #tpu.memory_space<vmem>>, vector<4x32xbf16>
    %cst_59 = arith.constant dense<0.000000e+00> : vector<4x64xf32>
    %67 = tpu.matmul %66, %65, %cst_59 {dimension_numbers = #tpu.dot_dimension_numbers<[1], [0], [0], [1], [0, 0, 1, 1], [], []>} : vector<4x32xbf16>, vector<32x64xbf16>, vector<4x64xf32> -> vector<4x64xf32>
    %c0_60 = arith.constant 0 : index
    %c0_61 = arith.constant 0 : index
    %68 = vector.load %arg4[%c0_60, %c0_61] : memref<4x1xf32, #tpu.memory_space<vmem>>, vector<4x1xf32>
    %69 = vector.broadcast %68 : vector<4x1xf32> to vector<4x64xf32>
    %70 = arith.addf %67, %69 : vector<4x64xf32>
    %c0_62 = arith.constant 0 : index
    %c0_63 = arith.constant 0 : index
    %71 = vector.load %arg5[%c0_62, %c0_63] : memref<32x32xbf16, #tpu.memory_space<vmem>>, vector<32x32xbf16>
    %cst_64 = arith.constant dense<0.000000e+00> : vector<32x64xf32>
    %72 = tpu.matmul %71, %65, %cst_64 {dimension_numbers = #tpu.dot_dimension_numbers<[1], [0], [0], [1], [0, 0, 1, 1], [], []>} : vector<32x32xbf16>, vector<32x64xbf16>, vector<32x64xf32> -> vector<32x64xf32>
    %c0_65 = arith.constant 0 : index
    %c0_66 = arith.constant 0 : index
    %73 = vector.load %arg6[%c0_65, %c0_66] : memref<32x1xf32, #tpu.memory_space<vmem>>, vector<32x1xf32>
    %74 = vector.broadcast %73 : vector<32x1xf32> to vector<32x64xf32>
    %75 = arith.addf %72, %74 : vector<32x64xf32>
    %76 = arith.truncf %70 : vector<4x64xf32> to vector<4x64xbf16>
    %c0_67 = arith.constant 0 : index
    %c0_68 = arith.constant 0 : index
    %c192 = arith.constant 192 : index
    %77 = vector.load %arg7[%c0_67, %c0_68, %c192] : memref<1x4x256xbf16, #tpu.memory_space<vmem>>, vector<1x4x64xbf16>
    %78 = vector.shape_cast %77 : vector<1x4x64xbf16> to vector<4x64xbf16>
    %79 = vector.shape_cast %76 : vector<4x64xbf16> to vector<1x4x64xbf16>
    tpu.vector_store %arg7[%c0_67, %c0_68, %c192], %79 {strides = array<i32>} : memref<1x4x256xbf16, #tpu.memory_space<vmem>>, vector<1x4x64xbf16>,
    %80 = arith.truncf %75 : vector<32x64xf32> to vector<32x64xbf16>
    %c0_69 = arith.constant 0 : index
    %c0_70 = arith.constant 0 : index
    %c192_71 = arith.constant 192 : index
    %81 = vector.load %arg8[%c0_69, %c0_70, %c192_71] : memref<1x32x256xbf16, #tpu.memory_space<vmem>>, vector<1x32x64xbf16>
    %82 = vector.shape_cast %81 : vector<1x32x64xbf16> to vector<32x64xbf16>
    %83 = vector.shape_cast %80 : vector<32x64xbf16> to vector<1x32x64xbf16>
    tpu.vector_store %arg8[%c0_69, %c0_70, %c192_71], %83 {strides = array<i32>} : memref<1x32x256xbf16, #tpu.memory_space<vmem>>, vector<1x32x64xbf16>,
    return
  }
  func.func @transform_0(%arg0: i32, %arg1: i32) -> (i32, i32, i32, i32) {
    %c0_i32 = arith.constant 0 : i32
    %c0_i32_0 = arith.constant 0 : i32
    %c0_i32_1 = arith.constant 0 : i32
    return %arg1, %arg0, %c0_i32, %c0_i32_0 : i32, i32, i32, i32
  }
  func.func @transform_1(%arg0: i32, %arg1: i32) -> (i32, i32) {
    %c0_i32 = arith.constant 0 : i32
    %c0_i32_0 = arith.constant 0 : i32
    %c0_i32_1 = arith.constant 0 : i32
    return %c0_i32, %c0_i32_0 : i32, i32
  }
  func.func @transform_2(%arg0: i32, %arg1: i32) -> (i32, i32) {
    %c0_i32 = arith.constant 0 : i32
    %c0_i32_0 = arith.constant 0 : i32
    %c0_i32_1 = arith.constant 0 : i32
    return %c0_i32, %c0_i32_0 : i32, i32
  }
  func.func @transform_3(%arg0: i32, %arg1: i32) -> (i32, i32) {
    %c0_i32 = arith.constant 0 : i32
    %c0_i32_0 = arith.constant 0 : i32
    %c0_i32_1 = arith.constant 0 : i32
    return %c0_i32, %c0_i32_0 : i32, i32
  }
  func.func @transform_4(%arg0: i32, %arg1: i32) -> (i32, i32) {
    %c0_i32 = arith.constant 0 : i32
    %c0_i32_0 = arith.constant 0 : i32
    %c0_i32_1 = arith.constant 0 : i32
    return %c0_i32, %c0_i32_0 : i32, i32
  }
  func.func @transform_5(%arg0: i32, %arg1: i32) -> (i32, i32, i32) {
    %c0_i32 = arith.constant 0 : i32
    %c0_i32_0 = arith.constant 0 : i32
    return %arg0, %c0_i32, %arg1 : i32, i32, i32
  }
  func.func @transform_6(%arg0: i32, %arg1: i32) -> (i32, i32, i32) {
    %c0_i32 = arith.constant 0 : i32
    %c0_i32_0 = arith.constant 0 : i32
    return %arg0, %c0_i32, %arg1 : i32, i32, i32
  }
}

</mosaic_0001>

<llo_original>
// kernel: tpu_custom_call.1
$region0: #{tpu_custom_call.1}
  #allocation0 [shape = 'u32[]', space=smem, size = 0x4, offset = 0x4, fixed_abs, tag = 'smem constant byte address 0x4 - core index']
  #allocation1 [shape = 'u32[144,128]{1,0:T(1,128)}', space=vmem, size = 0x12000, scoped, tag = 'internal scratch']
  #allocation8 [shape = 's32[]', space=sflag, size = 0x4, offset = 0, fixed_abs, tag = 'sflag constant byte address 0x0 - dummy sync flag']
  %s0 = inlined_call_operand.hbm [shape: f32[4,2,32,64], index: 0, kind: input, shape index: {}]
  %s1 = inlined_call_operand.vmem [shape: bf16[4,32], index: 1, kind: input, shape index: {}]
  %s2 = inlined_call_operand.vmem [shape: f32[4,1], index: 2, kind: input, shape index: {}]
  %s3 = inlined_call_operand.vmem [shape: bf16[32,32], index: 3, kind: input, shape index: {}]
  %s4 = inlined_call_operand.vmem [shape: f32[32,1], index: 4, kind: input, shape index: {}]
  %s5 = inlined_call_operand.hbm [shape: bf16[2,4,256], index: 5, kind: output, shape index: {0}]
  %s6 = inlined_call_operand.hbm [shape: bf16[2,32,256], index: 6, kind: output, shape index: {1}]
  %7 = xla_tuple %s5, %s6
  %s8 = sld [smem:[#allocation0]]
  $region65: #{tpu_custom_call.1} parent=0
    _
  %s10 = ssub.s32 1, %s8
  %s11 = scalar_select 0, %s10, %s8
  $region1: #{tpu_custom_call.1} parent=0
    #allocation2 [shape = 'u8[131072]{0}', space=vmem, size = 0x20000, scoped, tag = 'input window, operand 0']
    #allocation3 [shape = 's32[2]{0}', space=sflag, size = 0x8, scoped, tag = 'scoped memory for tpu_custom_call.1']
    #allocation4 [shape = 's32[2]{0}', space=sflag, size = 0x8, scoped, tag = 'scoped memory for tpu_custom_call.1']
    #allocation5 [shape = 'u8[4096]{0}', space=vmem, size = 0x1000, scoped, tag = 'output window, operand 0']
    #allocation6 [shape = 'u8[32768]{0}', space=vmem, size = 0x8000, scoped, tag = 'output window, operand 1']
    #allocation7 [shape = 's32[2]{0}', space=sflag, size = 0x8, scoped, tag = 'scoped memory for tpu_custom_call.1']
    %12 = vsyncpa [#allocation3], 0
    %s13 = scalar_lea.sflag [#allocation3], 1
    %14 = vsyncpa %s13, 0
    %15 = vsyncpa [#allocation4], 0
    %s16 = scalar_lea.sflag [#allocation4], 1
    %17 = vsyncpa %s16, 0
    %18 = vsyncpa [#allocation7], 0
    %s19 = scalar_lea.sflag [#allocation7], 1
    %20 = vsyncpa %s19, 0
    loop: start=0, step=1, limit=4
    $region2: #{tpu_custom_call.1} parent=1 // loop_pre_header
      _
    $region3: #{tpu_custom_call.1} parent=1 // loop_header
      %s22 = sphi 0, %s26
      %p23 = scmp.ge.s32.totalorder %s22, 4
      %s29 = sphi 0, %s41
      %s30 = sphi 0, %s37
      %s31 = sphi 0, %s29
      %s32 = sphi 0, %s30
      %s33 = sphi 0, %s31
      %s34 = sphi 0, %s32
      %s46 = sphi 0, %s48
      %s49 = sphi 0, %s46
      %s50 = sphi 0, %s49
      %s66 = sphi 0, %s50
      %s70 = sphi 0, %s70
      %s72 = sphi 0, %s70
      %s73 = sphi 0, %s72
      %s87 = sphi 0, %s73
      %s91 = sphi 0, %s91
      %s93 = sphi 0, %s91
      %s94 = sphi 0, %s93
      %s108 = sphi 0, %s94
      %s112 = sphi 0, %s112
      %s114 = sphi 0, %s112
      %s115 = sphi 0, %s114
      %s129 = sphi 0, %s115
      %s133 = sphi 0, %s133
      %s135 = sphi 0, %s133
      %s136 = sphi 0, %s135
      %s150 = sphi 0, %s136
      %s158 = sphi 0, %s160
      %s161 = sphi 0, %s158
      %s162 = sphi 0, %s161
      %s178 = sphi 0, %s162
      %s186 = sphi 0, %s188
      %s189 = sphi 0, %s186
      %s190 = sphi 0, %s189
      %s206 = sphi 0, %s190
    $region4: #{tpu_custom_call.1} parent=1 // loop_header_branch
      %25 = sbr.rel (%p23) target = $region8
    $region5: #{tpu_custom_call.1} parent=1 // loop_body
      %s27 = ssub.s32 %s22, 1
      %s28 = ssub.s32 %s22, 2
      %s35 = sadd.s32 1, %s30
      %p36 = scmp.ge.s32.totalorder %s35, 1
      %s37 = scalar_select %p36, 0, %s35
      %s38 = sadd.s32 1, %s29
      %s39 = scalar_select %p36, %s38, %s29
      %p40 = scmp.ge.s32.totalorder %s39, 2
      %s41 = scalar_select %p40, 0, %s39
      %s42 = ssub.s32 %s30, %s37
      %s43 = ssub.s32 %s29, %s41
      %s44 = sor.u32 %s42, %s43
      %p45 = scmp.eq.s32.totalorder %s44, 0
      %s47 = sadd.s32 %s46, 1
      %s48 = scalar_select %p45, %s46, %s47
      %p51 = pneg %p45
      %p52 = scmp.eq.s32.totalorder %s22, 1
      %p53 = por %p51, %p52
      %p54 = scmp.ne.s32.totalorder %s46, %s49
      %p55 = scmp.eq.s32.totalorder %s22, 0
      %p56 = por %p54, %p55
      %p57 = scmp.ne.s32.totalorder %s46, %s49
      %p58 = scmp.eq.s32.totalorder %s27, 1
      %p59 = por %p57, %p58
      %p60 = scmp.ne.s32.totalorder %s49, %s50
      %p61 = scmp.eq.s32.totalorder %s27, 0
      %p62 = por %p60, %p61
      %p63 = scmp.ne.s32.totalorder %s49, %s50
      %p64 = scmp.eq.s32.totalorder %s28, 1
      %p65 = por %p63, %p64
      %p67 = scmp.ne.s32.totalorder %s50, %s66
      %p68 = scmp.eq.s32.totalorder %s28, 0
      %p69 = por %p67, %p68
      %s71 = sadd.s32 %s70, 1
      %p74 = scmp.eq.s32.totalorder %s22, 1
      %p75 = scmp.ne.s32.totalorder %s70, %s72
      %p76 = scmp.eq.s32.totalorder %s22, 0
      %p77 = por %p75, %p76
      %p78 = scmp.ne.s32.totalorder %s70, %s72
      %p79 = scmp.eq.s32.totalorder %s27, 1
      %p80 = por %p78, %p79
      %p81 = scmp.ne.s32.totalorder %s72, %s73
      %p82 = scmp.eq.s32.totalorder %s27, 0
      %p83 = por %p81, %p82
      %p84 = scmp.ne.s32.totalorder %s72, %s73
      %p85 = scmp.eq.s32.totalorder %s28, 1
      %p86 = por %p84, %p85
      %p88 = scmp.ne.s32.totalorder %s73, %s87
      %p89 = scmp.eq.s32.totalorder %s28, 0
      %p90 = por %p88, %p89
      %s92 = sadd.s32 %s91, 1
      %p95 = scmp.eq.s32.totalorder %s22, 1
      %p96 = scmp.ne.s32.totalorder %s91, %s93
      %p97 = scmp.eq.s32.totalorder %s22, 0
      %p98 = por %p96, %p97
      %p99 = scmp.ne.s32.totalorder %s91, %s93
      %p100 = scmp.eq.s32.totalorder %s27, 1
      %p101 = por %p99, %p100
      %p102 = scmp.ne.s32.totalorder %s93, %s94
      %p103 = scmp.eq.s32.totalorder %s27, 0
      %p104 = por %p102, %p103
      %p105 = scmp.ne.s32.totalorder %s93, %s94
      %p106 = scmp.eq.s32.totalorder %s28, 1
      %p107 = por %p105, %p106
      %p109 = scmp.ne.s32.totalorder %s94, %s108
      %p110 = scmp.eq.s32.totalorder %s28, 0
      %p111 = por %p109, %p110
      %s113 = sadd.s32 %s112, 1
      %p116 = scmp.eq.s32.totalorder %s22, 1
      %p117 = scmp.ne.s32.totalorder %s112, %s114
      %p118 = scmp.eq.s32.totalorder %s22, 0
      %p119 = por %p117, %p118
      %p120 = scmp.ne.s32.totalorder %s112, %s114
      %p121 = scmp.eq.s32.totalorder %s27, 1
      %p122 = por %p120, %p121
      %p123 = scmp.ne.s32.totalorder %s114, %s115
      %p124 = scmp.eq.s32.totalorder %s27, 0
      %p125 = por %p123, %p124
      %p126 = scmp.ne.s32.totalorder %s114, %s115
      %p127 = scmp.eq.s32.totalorder %s28, 1
      %p128 = por %p126, %p127
      %p130 = scmp.ne.s32.totalorder %s115, %s129
      %p131 = scmp.eq.s32.totalorder %s28, 0
      %p132 = por %p130, %p131
      %s134 = sadd.s32 %s133, 1
      %p137 = scmp.eq.s32.totalorder %s22, 1
      %p138 = scmp.ne.s32.totalorder %s133, %s135
      %p139 = scmp.eq.s32.totalorder %s22, 0
      %p140 = por %p138, %p139
      %p141 = scmp.ne.s32.totalorder %s133, %s135
      %p142 = scmp.eq.s32.totalorder %s27, 1
      %p143 = por %p141, %p142
      %p144 = scmp.ne.s32.totalorder %s135, %s136
      %p145 = scmp.eq.s32.totalorder %s27, 0
      %p146 = por %p144, %p145
      %p147 = scmp.ne.s32.totalorder %s135, %s136
      %p148 = scmp.eq.s32.totalorder %s28, 1
      %p149 = por %p147, %p148
      %p151 = scmp.ne.s32.totalorder %s136, %s150
      %p152 = scmp.eq.s32.totalorder %s28, 0
      %p153 = por %p151, %p152
      %s154 = ssub.s32 %s29, %s41
      %s155 = ssub.s32 %s30, %s37
      %s156 = sor.u32 %s154, %s155
      %p157 = scmp.eq.s32.totalorder %s156, 0
      %s159 = sadd.s32 %s158, 1
      %s160 = scalar_select %p157, %s158, %s159
      %p163 = pneg %p157
      %p164 = scmp.eq.s32.totalorder %s22, 1
      %p165 = por %p163, %p164
      %p166 = scmp.ne.s32.totalorder %s158, %s161
      %p167 = scmp.eq.s32.totalorder %s22, 0
      %p168 = por %p166, %p167
      %p169 = scmp.ne.s32.totalorder %s158, %s161
      %p170 = scmp.eq.s32.totalorder %s27, 1
      %p171 = por %p169, %p170
      %p172 = scmp.ne.s32.totalorder %s161, %s162
      %p173 = scmp.eq.s32.totalorder %s27, 0
      %p174 = por %p172, %p173
      %p175 = scmp.ne.s32.totalorder %s161, %s162
      %p176 = scmp.eq.s32.totalorder %s28, 1
      %p177 = por %p175, %p176
      %p179 = scmp.ne.s32.totalorder %s162, %s178
      %p180 = scmp.eq.s32.totalorder %s28, 0
      %p181 = por %p179, %p180
      %s182 = ssub.s32 %s29, %s41
      %s183 = ssub.s32 %s30, %s37
      %s184 = sor.u32 %s182, %s183
      %p185 = scmp.eq.s32.totalorder %s184, 0
      %s187 = sadd.s32 %s186, 1
      %s188 = scalar_select %p185, %s186, %s187
      %p191 = pneg %p185
      %p192 = scmp.eq.s32.totalorder %s22, 1
      %p193 = por %p191, %p192
      %p194 = scmp.ne.s32.totalorder %s186, %s189
      %p195 = scmp.eq.s32.totalorder %s22, 0
      %p196 = por %p194, %p195
      %p197 = scmp.ne.s32.totalorder %s186, %s189
      %p198 = scmp.eq.s32.totalorder %s27, 1
      %p199 = por %p197, %p198
      %p200 = scmp.ne.s32.totalorder %s189, %s190
      %p201 = scmp.eq.s32.totalorder %s27, 0
      %p202 = por %p200, %p201
      %p203 = scmp.ne.s32.totalorder %s189, %s190
      %p204 = scmp.eq.s32.totalorder %s28, 1
      %p205 = por %p203, %p204
      %p207 = scmp.ne.s32.totalorder %s190, %s206
      %p208 = scmp.eq.s32.totalorder %s28, 0
      %p209 = por %p207, %p208
      %p210 = scmp.le.s32.totalorder 1, %s22
      %p211 = scmp.lt.s32.totalorder %s22, 3
      %p212 = pnand %p210, %p211
      %p213 = pneg %p212
      // Predicated region
      $region9: #{tpu_custom_call.1} parent=5 // pred_check
        _
      $region10: #{tpu_custom_call.1} parent=5 // pred_check_branch
        %215 = sbr.rel (%p212) target = $region12
      $region11: #{tpu_custom_call.1} parent=5 // pred_region
        %s216 = ssub.s32 %s22, 1
        // Predicated region
        $region13: #{tpu_custom_call.1} parent=11 // pred_check
          %p217 = pneg %p83
        $region14: #{tpu_custom_call.1} parent=11 // pred_check_branch
          %219 = sbr.rel (%p217) target = $region16
        $region15: #{tpu_custom_call.1} parent=11 // pred_region
          _
        $region16: #{tpu_custom_call.1} parent=11 // pred_fallthru
          _
        // Predicated region
        $region17: #{tpu_custom_call.1} parent=11 // pred_check
          %p220 = pneg %p104
        $region18: #{tpu_custom_call.1} parent=11 // pred_check_branch
          %222 = sbr.rel (%p220) target = $region20
        $region19: #{tpu_custom_call.1} parent=11 // pred_region
          _
        $region20: #{tpu_custom_call.1} parent=11 // pred_fallthru
          _
        // Predicated region
        $region21: #{tpu_custom_call.1} parent=11 // pred_check
          %p223 = pneg %p125
        $region22: #{tpu_custom_call.1} parent=11 // pred_check_branch
          %225 = sbr.rel (%p223) target = $region24
        $region23: #{tpu_custom_call.1} parent=11 // pred_region
          _
        $region24: #{tpu_custom_call.1} parent=11 // pred_fallthru
          _
        // Predicated region
        $region25: #{tpu_custom_call.1} parent=11 // pred_check
          %p226 = pneg %p146
        $region26: #{tpu_custom_call.1} parent=11 // pred_check_branch
          %228 = sbr.rel (%p226) target = $region28
        $region27: #{tpu_custom_call.1} parent=11 // pred_region
          _
        $region28: #{tpu_custom_call.1} parent=11 // pred_fallthru
          _
      $region12: #{tpu_custom_call.1} parent=5 // pred_fallthru
        _
      %p229 = scmp.lt.s32.totalorder %s22, 2
      // Predicated region
      $region29: #{tpu_custom_call.1} parent=5 // pred_check
        %p230 = pneg %p229
      $region30: #{tpu_custom_call.1} parent=5 // pred_check_branch
        %232 = sbr.rel (%p230) target = $region32
      $region31: #{tpu_custom_call.1} parent=5 // pred_region
        // Predicated region
        $region33: #{tpu_custom_call.1} parent=31 // pred_check
          %p233 = pneg %p56
        $region34: #{tpu_custom_call.1} parent=31 // pred_check_branch
          %235 = sbr.rel (%p233) target = $region36
        $region35: #{tpu_custom_call.1} parent=31 // pred_region
          #allocation9 [shape = 'u32[6]{0}', space=smem, size = 0x18, scoped, tag = 'DMA stride descriptor']
          %s236 = sand.u32 %s46, 1
          %s237 = scalar_lea.sflag [#allocation3], %s236
          %s238 = sand.u32 %s46, 1
          %s239 = smul.addr %s238, 128
          %s240 = scalar_lea.vmem [#allocation2], %s239
          %s241 = smul.u32 4, %s30
          %s243 = ssub.s32 2048, 2048
          %244 = vsyncadd %s237, %s243
          %s245 = smul.addr %s29, 4
          %s246 = smul.addr %s241, 8
          %s247 = sadd.s32 %s245, %s246
          %s248 = smul.addr %s247, 128
          %s249 = scalar_lea.hbm %s0, %s248
          %s251 = sshll.u32 1, 14
          %s252 = sxor.u32 4294967295, %s251
          %s254 = sld [smem:[#allocation0]]
          %s255 = sadd.s32 2, %s254
          %s257 = sshll.u32 7, 26
          %s258 = sxor.u32 4294967295, %s257
          %s259 = sand.u32 0, %s258
          %s260 = sshll.u32 %s255, 26
          %s261 = sor.u32 %s259, %s260
          %s262 = sshll.u32 %s240, 4
          %s263 = int_to_ptr.vmem [resolvable:$true] %s262
          %269 = sst [smem:[#allocation9]] 1024
          %s270 = scalar_lea.smem [#allocation9], 1
          %271 = sst [smem:[%s270]] 512
          %s272 = scalar_lea.smem [#allocation9], 2
          %273 = sst [smem:[%s272]] 4
          %s274 = scalar_lea.smem [#allocation9], 3
          %275 = sst [smem:[%s274]] 128
          %s276 = scalar_lea.smem [#allocation9], 4
          %277 = sst [smem:[%s276]] 128
          %s278 = scalar_lea.smem [#allocation9], 5
          %279 = sst [smem:[%s278]] 8
          %281 = dma.general %s249, 2048, %s263, %s237, [#allocation8], [#allocation9], %s261, 0
        $region36: #{tpu_custom_call.1} parent=31 // pred_fallthru
          _
      $region32: #{tpu_custom_call.1} parent=5 // pred_fallthru
        _
      %p282 = scmp.le.s32.totalorder 1, %s22
      %p283 = scmp.lt.s32.totalorder %s22, 3
      %p284 = pnand %p282, %p283
      %p285 = pneg %p284
      // Predicated region
      $region37: #{tpu_custom_call.1} parent=5 // pred_check
        _
      $region38: #{tpu_custom_call.1} parent=5 // pred_check_branch
        %287 = sbr.rel (%p284) target = $region40
      $region39: #{tpu_custom_call.1} parent=5 // pred_region
        %s288 = ssub.s32 %s22, 1
        %s289 = sand.u32 %s49, 1
        %s290 = scalar_lea.sflag [#allocation3], %s289
        %s291 = sand.u32 %s49, 1
        %s292 = smul.addr %s291, 128
        %s293 = scalar_lea.vmem [#allocation2], %s292
        // Predicated region
        $region41: #{tpu_custom_call.1} parent=39 // pred_check
          %p294 = pneg %p62
        $region42: #{tpu_custom_call.1} parent=39 // pred_check_branch
          %296 = sbr.rel (%p294) target = $region44
        $region43: #{tpu_custom_call.1} parent=39 // pred_region
          %297 = dma.done %s290, 2048
        $region44: #{tpu_custom_call.1} parent=39 // pred_fallthru
          _
        %s298 = sand.u32 %s49, 1
        %s299 = scalar_lea.sflag [#allocation3], %s298
        %s300 = sand.u32 %s49, 1
        %s301 = smul.addr %s300, 128
        %s302 = scalar_lea.vmem [#allocation2], %s301
        %p303 = pneg %p62
        %p304 = pneg %p59
        %p305 = pneg %p83
        %p306 = pneg %p80
        %p307 = pneg %p104
        %p308 = pneg %p101
        %p309 = pneg %p125
        %p310 = pneg %p122
        %p311 = pneg %p146
        %p312 = pneg %p143
        %p313 = pneg %p174
        %p314 = pneg %p171
        %s315 = sand.u32 %s161, 1
        %s316 = scalar_lea.sflag [#allocation4], %s315
        %s317 = sand.u32 %s161, 1
        %s318 = smul.addr %s317, 4
        %s319 = scalar_lea.vmem [#allocation5], %s318
        %p320 = pneg %p202
        %p321 = pneg %p199
        %s322 = sand.u32 %s189, 1
        %s323 = scalar_lea.sflag [#allocation7], %s322
        %s324 = sand.u32 %s189, 1
        %s325 = smul.addr %s324, 32
        %s326 = scalar_lea.vmem [#allocation6], %s325
        %s327 = smul.u32 4, %s32
        %s328 = smul.u32 2, %s32
        %s329 = smul.u32 2, %s32
        %v331 = vld [vmem:[%s293] sm:$0xff]
        %v332 = vld [vmem:[%s293 + $0x8] sm:$0xff]
        %v333 = vld [vmem:[%s293 + $0x10] sm:$0xff]
        %v334 = vld [vmem:[%s293 + $0x18] sm:$0xff]
        %v335 = vpack.c.bf16 %v332, %v331
        %v336 = vpack.c.bf16 %v334, %v333
        %v337 = vld [vmem:[%s1] sm:$0x3]
        %v338 = vld [vmem:[%s2] sm:$0xf]
        %340 = vset.pattern.permute.xlu0 0
        %341 = vperm.xlu0 %340, %v338
        %v342 = vpop.permute.xlu0 %341
        %vm344 = vcmask 261120
        %v346 = vsel %vm344, %v337, 0
        %348 = vmatprep.subr.bf16.mxu0 0
        %349 = vmatpush1.bf16.msra.mxu0 %v335
        %350 = vmatprep.subr.bf16.mxu0 0
        %351 = vmatpush1.bf16.msra.mxu0 %v336
        %352 = vmatprep.subr.bf16.mxu0 0
        %353 = vmatpush1.bf16.msra.mxu0 0
        %354 = vmatprep.subr.bf16.mxu0 0
        %355 = vmatpush1.bf16.msra.mxu0 0
        %356 = vmatprep.subr.bf16.mxu0 0
        %357 = vmatpush1.bf16.msra.mxu0 0
        %358 = vmatprep.subr.bf16.mxu0 0
        %359 = vmatpush1.bf16.msra.mxu0 0
        %360 = vmatprep.subr.bf16.mxu0 0
        %361 = vmatpush1.bf16.msra.mxu0 0
        %362 = vmatprep.subr.bf16.mxu0 0
        %363 = vmatpush1.bf16.msra.mxu0 0
        %364 = vmatprep.subr.bf16.mxu0 0
        %365 = vmatpush1.bf16.msra.mxu0 0
        %366 = vmatprep.subr.bf16.mxu0 0
        %367 = vmatpush1.bf16.msra.mxu0 0
        %368 = vmatprep.subr.bf16.mxu0 0
        %369 = vmatpush1.bf16.msra.mxu0 0
        %370 = vmatprep.subr.bf16.mxu0 0
        %371 = vmatpush1.bf16.msra.mxu0 0
        %372 = vmatprep.subr.bf16.mxu0 0
        %373 = vmatpush1.bf16.msra.mxu0 0
        %374 = vmatprep.subr.bf16.mxu0 0
        %375 = vmatpush1.bf16.msra.mxu0 0
        %376 = vmatprep.subr.bf16.mxu0 0
        %377 = vmatpush1.bf16.msra.mxu0 0
        %378 = vmatprep.subr.bf16.mxu0 0
        %379 = vmatpush1.bf16.msra.mxu0 0
        %380 = vmatprep.mubr.bf16.mxu0 0
        %381 = vmatmul.mubr.bf16.gmra.mrb[0].mxu0 %v346
        %v382 = vpop.f32.mrb[0].mxu0
        %v383 = vadd.f32 %v342, %v382
        %v384 = vpop.f32.mrb[0].mxu0
        %v385 = vpop.f32.mrb[0].mxu0
        %v386 = vpop.f32.mrb[0].mxu0
        %387 = vdwg.mxu0
        %v388 = vld [vmem:[%s3] sm:$0xf]
        %v389 = vld [vmem:[%s3 + $0x4] sm:$0xf]
        %v390 = vld [vmem:[%s3 + $0x8] sm:$0xf]
        %v391 = vld [vmem:[%s3 + $0xc] sm:$0xf]
        %v392 = vld [vmem:[%s4] sm:$0xff]
        %v393 = vld [vmem:[%s4 + $0x8] sm:$0xff]
        %v394 = vld [vmem:[%s4 + $0x10] sm:$0xff]
        %v395 = vld [vmem:[%s4 + $0x18] sm:$0xff]
        %397 = vset.pattern.permute.xlu0 0
        %398 = vperm.xlu0 %397, %v392
        %v399 = vpop.permute.xlu0 %398
        %402 = vset.pattern.permute.xlu0 0
        %403 = vperm.xlu0 %402, %v393
        %v404 = vpop.permute.xlu0 %403
        %407 = vset.pattern.permute.xlu0 0
        %408 = vperm.xlu0 %407, %v394
        %v409 = vpop.permute.xlu0 %408
        %412 = vset.pattern.permute.xlu0 0
        %413 = vperm.xlu0 %412, %v395
        %v414 = vpop.permute.xlu0 %413
        %v420 = vunpack.c.l.b16 %v388
        %v421 = vunpack.c.l.b16 %v389
        %v422 = vunpack.c.l.b16 %v390
        %v423 = vunpack.c.l.b16 %v391
        %v424 = vpack.c.b16 %v421, %v420
        %v425 = vpack.c.b16 %v423, %v422
        %v427 = vsel %vm344, %v424, 0
        %v430 = vsel %vm344, %v425, 0
        %432 = vmatprep.subr.bf16.mxu0 0
        %433 = vmatpush1.bf16.msra.mxu0 %v335
        %434 = vmatprep.subr.bf16.mxu0 0
        %435 = vmatpush1.bf16.msra.mxu0 %v336
        %436 = vmatprep.subr.bf16.mxu0 0
        %437 = vmatpush1.bf16.msra.mxu0 0
        %438 = vmatprep.subr.bf16.mxu0 0
        %439 = vmatpush1.bf16.msra.mxu0 0
        %440 = vmatprep.subr.bf16.mxu0 0
        %441 = vmatpush1.bf16.msra.mxu0 0
        %442 = vmatprep.subr.bf16.mxu0 0
        %443 = vmatpush1.bf16.msra.mxu0 0
        %444 = vmatprep.subr.bf16.mxu0 0
        %445 = vmatpush1.bf16.msra.mxu0 0
        %446 = vmatprep.subr.bf16.mxu0 0
        %447 = vmatpush1.bf16.msra.mxu0 0
        %448 = vmatprep.subr.bf16.mxu0 0
        %449 = vmatpush1.bf16.msra.mxu0 0
        %450 = vmatprep.subr.bf16.mxu0 0
        %451 = vmatpush1.bf16.msra.mxu0 0
        %452 = vmatprep.subr.bf16.mxu0 0
        %453 = vmatpush1.bf16.msra.mxu0 0
        %454 = vmatprep.subr.bf16.mxu0 0
        %455 = vmatpush1.bf16.msra.mxu0 0
        %456 = vmatprep.subr.bf16.mxu0 0
        %457 = vmatpush1.bf16.msra.mxu0 0
        %458 = vmatprep.subr.bf16.mxu0 0
        %459 = vmatpush1.bf16.msra.mxu0 0
        %460 = vmatprep.subr.bf16.mxu0 0
        %461 = vmatpush1.bf16.msra.mxu0 0
        %462 = vmatprep.subr.bf16.mxu0 0
        %463 = vmatpush1.bf16.msra.mxu0 0
        %464 = vmatprep.mubr.bf16.mxu0 0
        %465 = vmatmul.mubr.bf16.gmra.mrb[0].mxu0 %v427
        %v466 = vpop.f32.mrb[0].mxu0
        %v467 = vadd.f32 %v399, %v466
        %v468 = vpop.f32.mrb[0].mxu0
        %v469 = vpop.f32.mrb[0].mxu0
        %v470 = vadd.f32 %v404, %v469
        %v471 = vpop.f32.mrb[0].mxu0
        %472 = vmatprep.mubr.bf16.mxu0 0
        %473 = vmatmul.mubr.bf16.gmra.mrb[0].mxu0 %v430
        %v474 = vpop.f32.mrb[0].mxu0
        %v475 = vadd.f32 %v409, %v474
        %v476 = vpop.f32.mrb[0].mxu0
        %v477 = vpop.f32.mrb[0].mxu0
        %v478 = vadd.f32 %v414, %v477
        %v479 = vpop.f32.mrb[0].mxu0
        %480 = vdwg.mxu0
        %v481 = vpack.c.bf16 %v383, %v383
        %vm482 = vcmask 517120
        %483 = vst.msk [vmem:[%s319] sm:$0x3] %vm482, %v481
        %v484 = vpack.c.bf16 %v470, %v467
        %v485 = vpack.c.bf16 %v478, %v475
        %v488 = vunpack.c.l.b16 %v484
        %v489 = vunpack.c.h.b16 %v484
        %v490 = vunpack.c.l.b16 %v485
        %v491 = vunpack.c.h.b16 %v485
        %v492 = vpack.c.b16 %v488, %v488
        %v493 = vpack.c.b16 %v489, %v489
        %v494 = vpack.c.b16 %v490, %v490
        %v495 = vpack.c.b16 %v491, %v491
        %vm500 = vcmask 519168
        %501 = vst.msk [vmem:[%s326] sm:$0xf] %vm500, %v492
        %502 = vst.msk [vmem:[%s326 + $0x8] sm:$0xf] %vm500, %v493
        %503 = vst.msk [vmem:[%s326 + $0x10] sm:$0xf] %vm500, %v494
        %504 = vst.msk [vmem:[%s326 + $0x18] sm:$0xf] %vm500, %v495
        %s505 = scalar_lea.vmem %s293, 32 [#allocation2]
        %v506 = vld [vmem:[%s505] sm:$0xff]
        %v507 = vld [vmem:[%s505 + $0x8] sm:$0xff]
        %v508 = vld [vmem:[%s505 + $0x10] sm:$0xff]
        %v509 = vld [vmem:[%s505 + $0x18] sm:$0xff]
        %v510 = vpack.c.bf16 %v507, %v506
        %v511 = vpack.c.bf16 %v509, %v508
        %v512 = vld [vmem:[%s1] sm:$0x3]
        %v513 = vld [vmem:[%s2] sm:$0xf]
        %515 = vset.pattern.permute.xlu0 0
        %516 = vperm.xlu0 %515, %v513
        %v517 = vpop.permute.xlu0 %516
        %v520 = vsel %vm344, %v512, 0
        %522 = vmatprep.subr.bf16.mxu0 0
        %523 = vmatpush1.bf16.msra.mxu0 %v510
        %524 = vmatprep.subr.bf16.mxu0 0
        %525 = vmatpush1.bf16.msra.mxu0 %v511
        %526 = vmatprep.subr.bf16.mxu0 0
        %527 = vmatpush1.bf16.msra.mxu0 0
        %528 = vmatprep.subr.bf16.mxu0 0
        %529 = vmatpush1.bf16.msra.mxu0 0
        %530 = vmatprep.subr.bf16.mxu0 0
        %531 = vmatpush1.bf16.msra.mxu0 0
        %532 = vmatprep.subr.bf16.mxu0 0
        %533 = vmatpush1.bf16.msra.mxu0 0
        %534 = vmatprep.subr.bf16.mxu0 0
        %535 = vmatpush1.bf16.msra.mxu0 0
        %536 = vmatprep.subr.bf16.mxu0 0
        %537 = vmatpush1.bf16.msra.mxu0 0
        %538 = vmatprep.subr.bf16.mxu0 0
        %539 = vmatpush1.bf16.msra.mxu0 0
        %540 = vmatprep.subr.bf16.mxu0 0
        %541 = vmatpush1.bf16.msra.mxu0 0
        %542 = vmatprep.subr.bf16.mxu0 0
        %543 = vmatpush1.bf16.msra.mxu0 0
        %544 = vmatprep.subr.bf16.mxu0 0
        %545 = vmatpush1.bf16.msra.mxu0 0
        %546 = vmatprep.subr.bf16.mxu0 0
        %547 = vmatpush1.bf16.msra.mxu0 0
        %548 = vmatprep.subr.bf16.mxu0 0
        %549 = vmatpush1.bf16.msra.mxu0 0
        %550 = vmatprep.subr.bf16.mxu0 0
        %551 = vmatpush1.bf16.msra.mxu0 0
        %552 = vmatprep.subr.bf16.mxu0 0
        %553 = vmatpush1.bf16.msra.mxu0 0
        %554 = vmatprep.mubr.bf16.mxu0 0
        %555 = vmatmul.mubr.bf16.gmra.mrb[0].mxu0 %v520
        %v556 = vpop.f32.mrb[0].mxu0
        %v557 = vadd.f32 %v517, %v556
        %v558 = vpop.f32.mrb[0].mxu0
        %v559 = vpop.f32.mrb[0].mxu0
        %v560 = vpop.f32.mrb[0].mxu0
        %561 = vdwg.mxu0
        %v562 = vld [vmem:[%s3] sm:$0xf]
        %v563 = vld [vmem:[%s3 + $0x4] sm:$0xf]
        %v564 = vld [vmem:[%s3 + $0x8] sm:$0xf]
        %v565 = vld [vmem:[%s3 + $0xc] sm:$0xf]
        %v566 = vld [vmem:[%s4] sm:$0xff]
        %v567 = vld [vmem:[%s4 + $0x8] sm:$0xff]
        %v568 = vld [vmem:[%s4 + $0x10] sm:$0xff]
        %v569 = vld [vmem:[%s4 + $0x18] sm:$0xff]
        %571 = vset.pattern.permute.xlu0 0
        %572 = vperm.xlu0 %571, %v566
        %v573 = vpop.permute.xlu0 %572
        %576 = vset.pattern.permute.xlu0 0
        %577 = vperm.xlu0 %576, %v567
        %v578 = vpop.permute.xlu0 %577
        %581 = vset.pattern.permute.xlu0 0
        %582 = vperm.xlu0 %581, %v568
        %v583 = vpop.permute.xlu0 %582
        %586 = vset.pattern.permute.xlu0 0
        %587 = vperm.xlu0 %586, %v569
        %v588 = vpop.permute.xlu0 %587
        %v594 = vunpack.c.l.b16 %v562
        %v595 = vunpack.c.l.b16 %v563
        %v596 = vunpack.c.l.b16 %v564
        %v597 = vunpack.c.l.b16 %v565
        %v598 = vpack.c.b16 %v595, %v594
        %v599 = vpack.c.b16 %v597, %v596
        %v601 = vsel %vm344, %v598, 0
        %v604 = vsel %vm344, %v599, 0
        %606 = vmatprep.subr.bf16.mxu0 0
        %607 = vmatpush1.bf16.msra.mxu0 %v510
        %608 = vmatprep.subr.bf16.mxu0 0
        %609 = vmatpush1.bf16.msra.mxu0 %v511
        %610 = vmatprep.subr.bf16.mxu0 0
        %611 = vmatpush1.bf16.msra.mxu0 0
        %612 = vmatprep.subr.bf16.mxu0 0
        %613 = vmatpush1.bf16.msra.mxu0 0
        %614 = vmatprep.subr.bf16.mxu0 0
        %615 = vmatpush1.bf16.msra.mxu0 0
        %616 = vmatprep.subr.bf16.mxu0 0
        %617 = vmatpush1.bf16.msra.mxu0 0
        %618 = vmatprep.subr.bf16.mxu0 0
        %619 = vmatpush1.bf16.msra.mxu0 0
        %620 = vmatprep.subr.bf16.mxu0 0
        %621 = vmatpush1.bf16.msra.mxu0 0
        %622 = vmatprep.subr.bf16.mxu0 0
        %623 = vmatpush1.bf16.msra.mxu0 0
        %624 = vmatprep.subr.bf16.mxu0 0
        %625 = vmatpush1.bf16.msra.mxu0 0
        %626 = vmatprep.subr.bf16.mxu0 0
        %627 = vmatpush1.bf16.msra.mxu0 0
        %628 = vmatprep.subr.bf16.mxu0 0
        %629 = vmatpush1.bf16.msra.mxu0 0
        %630 = vmatprep.subr.bf16.mxu0 0
        %631 = vmatpush1.bf16.msra.mxu0 0
        %632 = vmatprep.subr.bf16.mxu0 0
        %633 = vmatpush1.bf16.msra.mxu0 0
        %634 = vmatprep.subr.bf16.mxu0 0
        %635 = vmatpush1.bf16.msra.mxu0 0
        %636 = vmatprep.subr.bf16.mxu0 0
        %637 = vmatpush1.bf16.msra.mxu0 0
        %638 = vmatprep.mubr.bf16.mxu0 0
        %639 = vmatmul.mubr.bf16.gmra.mrb[0].mxu0 %v601
        %v640 = vpop.f32.mrb[0].mxu0
        %v641 = vadd.f32 %v573, %v640
        %v642 = vpop.f32.mrb[0].mxu0
        %v643 = vpop.f32.mrb[0].mxu0
        %v644 = vadd.f32 %v578, %v643
        %v645 = vpop.f32.mrb[0].mxu0
        %646 = vmatprep.mubr.bf16.mxu0 0
        %647 = vmatmul.mubr.bf16.gmra.mrb[0].mxu0 %v604
        %v648 = vpop.f32.mrb[0].mxu0
        %v649 = vadd.f32 %v583, %v648
        %v650 = vpop.f32.mrb[0].mxu0
        %v651 = vpop.f32.mrb[0].mxu0
        %v652 = vadd.f32 %v588, %v651
        %v653 = vpop.f32.mrb[0].mxu0
        %654 = vdwg.mxu0
        %v655 = vpack.c.bf16 %v557, %v557
        %v658 = vunpack.c.l.s4 1983009808
        %v659 = vunpack.c.0.s8 %v658
        %v660 = vlaneseq
        %v661 = vshrl.u32 %v660, 7
        %v662 = vsub.s32 %v659, %v661
        %v663 = vrot.slane %v655, %v662
        %664 = vrot.lane.b32.xlu0 %v663, 64
        %v665 = vpop.permute.xlu0 %664
        %vm667 = vcmask 1041920
        %668 = vst.msk [vmem:[%s319] sm:$0x3] %vm667, %v665
        %v669 = vpack.c.bf16 %v644, %v641
        %v670 = vpack.c.bf16 %v652, %v649
        %v673 = vunpack.c.l.b16 %v669
        %v674 = vunpack.c.h.b16 %v669
        %v675 = vunpack.c.l.b16 %v670
        %v676 = vunpack.c.h.b16 %v670
        %v677 = vpack.c.b16 %v673, %v673
        %v678 = vpack.c.b16 %v674, %v674
        %v679 = vpack.c.b16 %v675, %v675
        %v680 = vpack.c.b16 %v676, %v676
        %681 = vrot.lane.b32.xlu0 %v677, 64
        %v682 = vpop.permute.xlu0 %681
        %683 = vrot.lane.b32.xlu0 %v678, 64
        %v684 = vpop.permute.xlu0 %683
        %685 = vrot.lane.b32.xlu0 %v679, 64
        %v686 = vpop.permute.xlu0 %685
        %687 = vrot.lane.b32.xlu0 %v680, 64
        %v688 = vpop.permute.xlu0 %687
        %vm693 = vcmask 1043968
        %694 = vst.msk [vmem:[%s326] sm:$0xf] %vm693, %v682
        %695 = vst.msk [vmem:[%s326 + $0x8] sm:$0xf] %vm693, %v684
        %696 = vst.msk [vmem:[%s326 + $0x10] sm:$0xf] %vm693, %v686
        %697 = vst.msk [vmem:[%s326 + $0x18] sm:$0xf] %vm693, %v688
        %s698 = scalar_lea.vmem %s293, 64 [#allocation2]
        %v699 = vld [vmem:[%s698] sm:$0xff]
        %v700 = vld [vmem:[%s698 + $0x8] sm:$0xff]
        %v701 = vld [vmem:[%s698 + $0x10] sm:$0xff]
        %v702 = vld [vmem:[%s698 + $0x18] sm:$0xff]
        %v703 = vpack.c.bf16 %v700, %v699
        %v704 = vpack.c.bf16 %v702, %v701
        %v705 = vld [vmem:[%s1] sm:$0x3]
        %v706 = vld [vmem:[%s2] sm:$0xf]
        %708 = vset.pattern.permute.xlu0 0
        %709 = vperm.xlu0 %708, %v706
        %v710 = vpop.permute.xlu0 %709
        %v713 = vsel %vm344, %v705, 0
        %715 = vmatprep.subr.bf16.mxu0 0
        %716 = vmatpush1.bf16.msra.mxu0 %v703
        %717 = vmatprep.subr.bf16.mxu0 0
        %718 = vmatpush1.bf16.msra.mxu0 %v704
        %719 = vmatprep.subr.bf16.mxu0 0
        %720 = vmatpush1.bf16.msra.mxu0 0
        %721 = vmatprep.subr.bf16.mxu0 0
        %722 = vmatpush1.bf16.msra.mxu0 0
        %723 = vmatprep.subr.bf16.mxu0 0
        %724 = vmatpush1.bf16.msra.mxu0 0
        %725 = vmatprep.subr.bf16.mxu0 0
        %726 = vmatpush1.bf16.msra.mxu0 0
        %727 = vmatprep.subr.bf16.mxu0 0
        %728 = vmatpush1.bf16.msra.mxu0 0
        %729 = vmatprep.subr.bf16.mxu0 0
        %730 = vmatpush1.bf16.msra.mxu0 0
        %731 = vmatprep.subr.bf16.mxu0 0
        %732 = vmatpush1.bf16.msra.mxu0 0
        %733 = vmatprep.subr.bf16.mxu0 0
        %734 = vmatpush1.bf16.msra.mxu0 0
        %735 = vmatprep.subr.bf16.mxu0 0
        %736 = vmatpush1.bf16.msra.mxu0 0
        %737 = vmatprep.subr.bf16.mxu0 0
        %738 = vmatpush1.bf16.msra.mxu0 0
        %739 = vmatprep.subr.bf16.mxu0 0
        %740 = vmatpush1.bf16.msra.mxu0 0
        %741 = vmatprep.subr.bf16.mxu0 0
        %742 = vmatpush1.bf16.msra.mxu0 0
        %743 = vmatprep.subr.bf16.mxu0 0
        %744 = vmatpush1.bf16.msra.mxu0 0
        %745 = vmatprep.subr.bf16.mxu0 0
        %746 = vmatpush1.bf16.msra.mxu0 0
        %747 = vmatprep.mubr.bf16.mxu0 0
        %748 = vmatmul.mubr.bf16.gmra.mrb[0].mxu0 %v713
        %v749 = vpop.f32.mrb[0].mxu0
        %v750 = vadd.f32 %v710, %v749
        %v751 = vpop.f32.mrb[0].mxu0
        %v752 = vpop.f32.mrb[0].mxu0
        %v753 = vpop.f32.mrb[0].mxu0
        %754 = vdwg.mxu0
        %v755 = vld [vmem:[%s3] sm:$0xf]
        %v756 = vld [vmem:[%s3 + $0x4] sm:$0xf]
        %v757 = vld [vmem:[%s3 + $0x8] sm:$0xf]
        %v758 = vld [vmem:[%s3 + $0xc] sm:$0xf]
        %v759 = vld [vmem:[%s4] sm:$0xff]
        %v760 = vld [vmem:[%s4 + $0x8] sm:$0xff]
        %v761 = vld [vmem:[%s4 + $0x10] sm:$0xff]
        %v762 = vld [vmem:[%s4 + $0x18] sm:$0xff]
        %764 = vset.pattern.permute.xlu0 0
        %765 = vperm.xlu0 %764, %v759
        %v766 = vpop.permute.xlu0 %765
        %769 = vset.pattern.permute.xlu0 0
        %770 = vperm.xlu0 %769, %v760
        %v771 = vpop.permute.xlu0 %770
        %774 = vset.pattern.permute.xlu0 0
        %775 = vperm.xlu0 %774, %v761
        %v776 = vpop.permute.xlu0 %775
        %779 = vset.pattern.permute.xlu0 0
        %780 = vperm.xlu0 %779, %v762
        %v781 = vpop.permute.xlu0 %780
        %v787 = vunpack.c.l.b16 %v755
        %v788 = vunpack.c.l.b16 %v756
        %v789 = vunpack.c.l.b16 %v757
        %v790 = vunpack.c.l.b16 %v758
        %v791 = vpack.c.b16 %v788, %v787
        %v792 = vpack.c.b16 %v790, %v789
        %v794 = vsel %vm344, %v791, 0
        %v797 = vsel %vm344, %v792, 0
        %799 = vmatprep.subr.bf16.mxu0 0
        %800 = vmatpush1.bf16.msra.mxu0 %v703
        %801 = vmatprep.subr.bf16.mxu0 0
        %802 = vmatpush1.bf16.msra.mxu0 %v704
        %803 = vmatprep.subr.bf16.mxu0 0
        %804 = vmatpush1.bf16.msra.mxu0 0
        %805 = vmatprep.subr.bf16.mxu0 0
        %806 = vmatpush1.bf16.msra.mxu0 0
        %807 = vmatprep.subr.bf16.mxu0 0
        %808 = vmatpush1.bf16.msra.mxu0 0
        %809 = vmatprep.subr.bf16.mxu0 0
        %810 = vmatpush1.bf16.msra.mxu0 0
        %811 = vmatprep.subr.bf16.mxu0 0
        %812 = vmatpush1.bf16.msra.mxu0 0
        %813 = vmatprep.subr.bf16.mxu0 0
        %814 = vmatpush1.bf16.msra.mxu0 0
        %815 = vmatprep.subr.bf16.mxu0 0
        %816 = vmatpush1.bf16.msra.mxu0 0
        %817 = vmatprep.subr.bf16.mxu0 0
        %818 = vmatpush1.bf16.msra.mxu0 0
        %819 = vmatprep.subr.bf16.mxu0 0
        %820 = vmatpush1.bf16.msra.mxu0 0
        %821 = vmatprep.subr.bf16.mxu0 0
        %822 = vmatpush1.bf16.msra.mxu0 0
        %823 = vmatprep.subr.bf16.mxu0 0
        %824 = vmatpush1.bf16.msra.mxu0 0
        %825 = vmatprep.subr.bf16.mxu0 0
        %826 = vmatpush1.bf16.msra.mxu0 0
        %827 = vmatprep.subr.bf16.mxu0 0
        %828 = vmatpush1.bf16.msra.mxu0 0
        %829 = vmatprep.subr.bf16.mxu0 0
        %830 = vmatpush1.bf16.msra.mxu0 0
        %831 = vmatprep.mubr.bf16.mxu0 0
        %832 = vmatmul.mubr.bf16.gmra.mrb[0].mxu0 %v794
        %v833 = vpop.f32.mrb[0].mxu0
        %v834 = vadd.f32 %v766, %v833
        %v835 = vpop.f32.mrb[0].mxu0
        %v836 = vpop.f32.mrb[0].mxu0
        %v837 = vadd.f32 %v771, %v836
        %v838 = vpop.f32.mrb[0].mxu0
        %839 = vmatprep.mubr.bf16.mxu0 0
        %840 = vmatmul.mubr.bf16.gmra.mrb[0].mxu0 %v797
        %v841 = vpop.f32.mrb[0].mxu0
        %v842 = vadd.f32 %v776, %v841
        %v843 = vpop.f32.mrb[0].mxu0
        %v844 = vpop.f32.mrb[0].mxu0
        %v845 = vadd.f32 %v781, %v844
        %v846 = vpop.f32.mrb[0].mxu0
        %847 = vdwg.mxu0
        %v848 = vpack.c.bf16 %v750, %v750
        %849 = vst.msk [vmem:[%s319 + $0x2] sm:$0x3] %vm482, %v848
        %v850 = vpack.c.bf16 %v837, %v834
        %v851 = vpack.c.bf16 %v845, %v842
        %v854 = vunpack.c.l.b16 %v850
        %v855 = vunpack.c.h.b16 %v850
        %v856 = vunpack.c.l.b16 %v851
        %v857 = vunpack.c.h.b16 %v851
        %v858 = vpack.c.b16 %v854, %v854
        %v859 = vpack.c.b16 %v855, %v855
        %v860 = vpack.c.b16 %v856, %v856
        %v861 = vpack.c.b16 %v857, %v857
        %866 = vst.msk [vmem:[%s326 + $0x4] sm:$0xf] %vm500, %v858
        %867 = vst.msk [vmem:[%s326 + $0xc] sm:$0xf] %vm500, %v859
        %868 = vst.msk [vmem:[%s326 + $0x14] sm:$0xf] %vm500, %v860
        %869 = vst.msk [vmem:[%s326 + $0x1c] sm:$0xf] %vm500, %v861
        %s870 = scalar_lea.vmem %s293, 96 [#allocation2]
        %v871 = vld [vmem:[%s870] sm:$0xff]
        %v872 = vld [vmem:[%s870 + $0x8] sm:$0xff]
        %v873 = vld [vmem:[%s870 + $0x10] sm:$0xff]
        %v874 = vld [vmem:[%s870 + $0x18] sm:$0xff]
        %v875 = vpack.c.bf16 %v872, %v871
        %v876 = vpack.c.bf16 %v874, %v873
        %v877 = vld [vmem:[%s1] sm:$0x3]
        %v878 = vld [vmem:[%s2] sm:$0xf]
        %880 = vset.pattern.permute.xlu0 0
        %881 = vperm.xlu0 %880, %v878
        %v882 = vpop.permute.xlu0 %881
        %v885 = vsel %vm344, %v877, 0
        %887 = vmatprep.subr.bf16.mxu0 0
        %888 = vmatpush1.bf16.msra.mxu0 %v875
        %889 = vmatprep.subr.bf16.mxu0 0
        %890 = vmatpush1.bf16.msra.mxu0 %v876
        %891 = vmatprep.subr.bf16.mxu0 0
        %892 = vmatpush1.bf16.msra.mxu0 0
        %893 = vmatprep.subr.bf16.mxu0 0
        %894 = vmatpush1.bf16.msra.mxu0 0
        %895 = vmatprep.subr.bf16.mxu0 0
        %896 = vmatpush1.bf16.msra.mxu0 0
        %897 = vmatprep.subr.bf16.mxu0 0
        %898 = vmatpush1.bf16.msra.mxu0 0
        %899 = vmatprep.subr.bf16.mxu0 0
        %900 = vmatpush1.bf16.msra.mxu0 0
        %901 = vmatprep.subr.bf16.mxu0 0
        %902 = vmatpush1.bf16.msra.mxu0 0
        %903 = vmatprep.subr.bf16.mxu0 0
        %904 = vmatpush1.bf16.msra.mxu0 0
        %905 = vmatprep.subr.bf16.mxu0 0
        %906 = vmatpush1.bf16.msra.mxu0 0
        %907 = vmatprep.subr.bf16.mxu0 0
        %908 = vmatpush1.bf16.msra.mxu0 0
        %909 = vmatprep.subr.bf16.mxu0 0
        %910 = vmatpush1.bf16.msra.mxu0 0
        %911 = vmatprep.subr.bf16.mxu0 0
        %912 = vmatpush1.bf16.msra.mxu0 0
        %913 = vmatprep.subr.bf16.mxu0 0
        %914 = vmatpush1.bf16.msra.mxu0 0
        %915 = vmatprep.subr.bf16.mxu0 0
        %916 = vmatpush1.bf16.msra.mxu0 0
        %917 = vmatprep.subr.bf16.mxu0 0
        %918 = vmatpush1.bf16.msra.mxu0 0
        %919 = vmatprep.mubr.bf16.mxu0 0
        %920 = vmatmul.mubr.bf16.gmra.mrb[0].mxu0 %v885
        %v921 = vpop.f32.mrb[0].mxu0
        %v922 = vadd.f32 %v882, %v921
        %v923 = vpop.f32.mrb[0].mxu0
        %v924 = vpop.f32.mrb[0].mxu0
        %v925 = vpop.f32.mrb[0].mxu0
        %926 = vdwg.mxu0
        %v927 = vld [vmem:[%s3] sm:$0xf]
        %v928 = vld [vmem:[%s3 + $0x4] sm:$0xf]
        %v929 = vld [vmem:[%s3 + $0x8] sm:$0xf]
        %v930 = vld [vmem:[%s3 + $0xc] sm:$0xf]
        %v931 = vld [vmem:[%s4] sm:$0xff]
        %v932 = vld [vmem:[%s4 + $0x8] sm:$0xff]
        %v933 = vld [vmem:[%s4 + $0x10] sm:$0xff]
        %v934 = vld [vmem:[%s4 + $0x18] sm:$0xff]
        %936 = vset.pattern.permute.xlu0 0
        %937 = vperm.xlu0 %936, %v931
        %v938 = vpop.permute.xlu0 %937
        %941 = vset.pattern.permute.xlu0 0
        %942 = vperm.xlu0 %941, %v932
        %v943 = vpop.permute.xlu0 %942
        %946 = vset.pattern.permute.xlu0 0
        %947 = vperm.xlu0 %946, %v933
        %v948 = vpop.permute.xlu0 %947
        %951 = vset.pattern.permute.xlu0 0
        %952 = vperm.xlu0 %951, %v934
        %v953 = vpop.permute.xlu0 %952
        %v959 = vunpack.c.l.b16 %v927
        %v960 = vunpack.c.l.b16 %v928
        %v961 = vunpack.c.l.b16 %v929
        %v962 = vunpack.c.l.b16 %v930
        %v963 = vpack.c.b16 %v960, %v959
        %v964 = vpack.c.b16 %v962, %v961
        %v966 = vsel %vm344, %v963, 0
        %v969 = vsel %vm344, %v964, 0
        %971 = vmatprep.subr.bf16.mxu0 0
        %972 = vmatpush1.bf16.msra.mxu0 %v875
        %973 = vmatprep.subr.bf16.mxu0 0
        %974 = vmatpush1.bf16.msra.mxu0 %v876
        %975 = vmatprep.subr.bf16.mxu0 0
        %976 = vmatpush1.bf16.msra.mxu0 0
        %977 = vmatprep.subr.bf16.mxu0 0
        %978 = vmatpush1.bf16.msra.mxu0 0
        %979 = vmatprep.subr.bf16.mxu0 0
        %980 = vmatpush1.bf16.msra.mxu0 0
        %981 = vmatprep.subr.bf16.mxu0 0
        %982 = vmatpush1.bf16.msra.mxu0 0
        %983 = vmatprep.subr.bf16.mxu0 0
        %984 = vmatpush1.bf16.msra.mxu0 0
        %985 = vmatprep.subr.bf16.mxu0 0
        %986 = vmatpush1.bf16.msra.mxu0 0
        %987 = vmatprep.subr.bf16.mxu0 0
        %988 = vmatpush1.bf16.msra.mxu0 0
        %989 = vmatprep.subr.bf16.mxu0 0
        %990 = vmatpush1.bf16.msra.mxu0 0
        %991 = vmatprep.subr.bf16.mxu0 0
        %992 = vmatpush1.bf16.msra.mxu0 0
        %993 = vmatprep.subr.bf16.mxu0 0
        %994 = vmatpush1.bf16.msra.mxu0 0
        %995 = vmatprep.subr.bf16.mxu0 0
        %996 = vmatpush1.bf16.msra.mxu0 0
        %997 = vmatprep.subr.bf16.mxu0 0
        %998 = vmatpush1.bf16.msra.mxu0 0
        %999 = vmatprep.subr.bf16.mxu0 0
        %1000 = vmatpush1.bf16.msra.mxu0 0
        %1001 = vmatprep.subr.bf16.mxu0 0
        %1002 = vmatpush1.bf16.msra.mxu0 0
        %1003 = vmatprep.mubr.bf16.mxu0 0
        %1004 = vmatmul.mubr.bf16.gmra.mrb[0].mxu0 %v966
        %v1005 = vpop.f32.mrb[0].mxu0
        %v1006 = vadd.f32 %v938, %v1005
        %v1007 = vpop.f32.mrb[0].mxu0
        %v1008 = vpop.f32.mrb[0].mxu0
        %v1009 = vadd.f32 %v943, %v1008
        %v1010 = vpop.f32.mrb[0].mxu0
        %1011 = vmatprep.mubr.bf16.mxu0 0
        %1012 = vmatmul.mubr.bf16.gmra.mrb[0].mxu0 %v969
        %v1013 = vpop.f32.mrb[0].mxu0
        %v1014 = vadd.f32 %v948, %v1013
        %v1015 = vpop.f32.mrb[0].mxu0
        %v1016 = vpop.f32.mrb[0].mxu0
        %v1017 = vadd.f32 %v953, %v1016
        %v1018 = vpop.f32.mrb[0].mxu0
        %1019 = vdwg.mxu0
        %v1020 = vpack.c.bf16 %v922, %v922
        %v1023 = vunpack.c.l.s4 1983009808
        %v1024 = vunpack.c.0.s8 %v1023
        %v1025 = vlaneseq
        %v1026 = vshrl.u32 %v1025, 7
        %v1027 = vsub.s32 %v1024, %v1026
        %v1028 = vrot.slane %v1020, %v1027
        %1029 = vrot.lane.b32.xlu0 %v1028, 64
        %v1030 = vpop.permute.xlu0 %1029
        %1032 = vst.msk [vmem:[%s319 + $0x2] sm:$0x3] %vm667, %v1030
        %v1033 = vpack.c.bf16 %v1009, %v1006
        %v1034 = vpack.c.bf16 %v1017, %v1014
        %v1037 = vunpack.c.l.b16 %v1033
        %v1038 = vunpack.c.h.b16 %v1033
        %v1039 = vunpack.c.l.b16 %v1034
        %v1040 = vunpack.c.h.b16 %v1034
        %v1041 = vpack.c.b16 %v1037, %v1037
        %v1042 = vpack.c.b16 %v1038, %v1038
        %v1043 = vpack.c.b16 %v1039, %v1039
        %v1044 = vpack.c.b16 %v1040, %v1040
        %1045 = vrot.lane.b32.xlu0 %v1041, 64
        %v1046 = vpop.permute.xlu0 %1045
        %1047 = vrot.lane.b32.xlu0 %v1042, 64
        %v1048 = vpop.permute.xlu0 %1047
        %1049 = vrot.lane.b32.xlu0 %v1043, 64
        %v1050 = vpop.permute.xlu0 %1049
        %1051 = vrot.lane.b32.xlu0 %v1044, 64
        %v1052 = vpop.permute.xlu0 %1051
        %1057 = vst.msk [vmem:[%s326 + $0x4] sm:$0xf] %vm693, %v1046
        %1058 = vst.msk [vmem:[%s326 + $0xc] sm:$0xf] %vm693, %v1048
        %1059 = vst.msk [vmem:[%s326 + $0x14] sm:$0xf] %vm693, %v1050
        %1060 = vst.msk [vmem:[%s326 + $0x1c] sm:$0xf] %vm693, %v1052
        %s1061 = sand.u32 %s161, 1
        %s1062 = scalar_lea.sflag [#allocation4], %s1061
        %s1063 = sand.u32 %s161, 1
        %s1064 = smul.addr %s1063, 4
        %s1065 = scalar_lea.vmem [#allocation5], %s1064
        %s1066 = sand.u32 %s189, 1
        %s1067 = scalar_lea.sflag [#allocation7], %s1066
        %s1068 = sand.u32 %s189, 1
        %s1069 = smul.addr %s1068, 32
        %s1070 = scalar_lea.vmem [#allocation6], %s1069
        // Predicated region
        $region45: #{tpu_custom_call.1} parent=39 // pred_check
          %p1071 = pneg %p171
        $region46: #{tpu_custom_call.1} parent=39 // pred_check_branch
          %1073 = sbr.rel (%p1071) target = $region48
        $region47: #{tpu_custom_call.1} parent=39 // pred_region
          %s1074 = smul.u32 2, %s32
          %s1076 = ssub.s32 64, 64
          %1077 = vsyncadd %s1062, %s1076
          %s1078 = smul.addr %s31, 2
          %s1079 = sadd.s32 %s1074, %s1078
          %s1080 = smul.addr %s1079, 32
          %s1081 = scalar_lea.hbm %s5, %s1080
          %s1083 = sshll.u32 %s1065, 4
          %s1084 = int_to_ptr.vmem [resolvable:$true] %s1083
          %1086 = dma.vmem_to_hbm [thread:$0]  %s1084, 64, %s1081, %s1062
        $region48: #{tpu_custom_call.1} parent=39 // pred_fallthru
          _
        // Predicated region
        $region49: #{tpu_custom_call.1} parent=39 // pred_check
          %p1087 = pneg %p199
        $region50: #{tpu_custom_call.1} parent=39 // pred_check_branch
          %1089 = sbr.rel (%p1087) target = $region52
        $region51: #{tpu_custom_call.1} parent=39 // pred_region
          %s1090 = smul.u32 2, %s32
          %s1092 = ssub.s32 512, 512
          %1093 = vsyncadd %s1067, %s1092
          %s1094 = smul.addr %s31, 8
          %s1095 = sadd.s32 %s1090, %s1094
          %s1096 = smul.addr %s1095, 64
          %s1097 = scalar_lea.hbm %s6, %s1096
          %s1098 = sshll.u32 %s1070, 4
          %s1099 = int_to_ptr.vmem [resolvable:$true] %s1098
          %1104 = dma.vmem_to_hbm [thread:$0]  %s1099, 512, %s1097, %s1067, 128, 128, 8
        $region52: #{tpu_custom_call.1} parent=39 // pred_fallthru
          _
      $region40: #{tpu_custom_call.1} parent=5 // pred_fallthru
        _
      %p1105 = scmp.le.s32.totalorder 2, %s22
      // Predicated region
      $region53: #{tpu_custom_call.1} parent=5 // pred_check
        %p1106 = pneg %p1105
      $region54: #{tpu_custom_call.1} parent=5 // pred_check_branch
        %1108 = sbr.rel (%p1106) target = $region56
      $region55: #{tpu_custom_call.1} parent=5 // pred_region
        %s1109 = ssub.s32 %s22, 2
        // Predicated region
        $region57: #{tpu_custom_call.1} parent=55 // pred_check
          %p1110 = pneg %p177
        $region58: #{tpu_custom_call.1} parent=55 // pred_check_branch
          %1112 = sbr.rel (%p1110) target = $region60
        $region59: #{tpu_custom_call.1} parent=55 // pred_region
          %s1113 = sand.u32 %s162, 1
          %s1114 = scalar_lea.sflag [#allocation4], %s1113
          %s1115 = sand.u32 %s162, 1
          %s1116 = smul.addr %s1115, 4
          %s1117 = scalar_lea.vmem [#allocation5], %s1116
          %1118 = dma.done %s1114, 64
        $region60: #{tpu_custom_call.1} parent=55 // pred_fallthru
          _
        // Predicated region
        $region61: #{tpu_custom_call.1} parent=55 // pred_check
          %p1119 = pneg %p205
        $region62: #{tpu_custom_call.1} parent=55 // pred_check_branch
          %1121 = sbr.rel (%p1119) target = $region64
        $region63: #{tpu_custom_call.1} parent=55 // pred_region
          %s1122 = sand.u32 %s190, 1
          %s1123 = scalar_lea.sflag [#allocation7], %s1122
          %s1124 = sand.u32 %s190, 1
          %s1125 = smul.addr %s1124, 32
          %s1126 = scalar_lea.vmem [#allocation6], %s1125
          %1127 = dma.done %s1123, 512
        $region64: #{tpu_custom_call.1} parent=55 // pred_fallthru
          _
      $region56: #{tpu_custom_call.1} parent=5 // pred_fallthru
        _
    $region6: #{tpu_custom_call.1} parent=1 // loop_footer
      %s26 = sadd.s32 1, %s22
    $region7: #{tpu_custom_call.1} parent=1 // loop_footer_branch
      %21 = sbr.rel target = $region3
    $region8: #{tpu_custom_call.1} parent=1 // loop_exit
      _
    %1128 = vsyncpa [#allocation3], 1
    %s1129 = scalar_lea.sflag [#allocation3], 1
    %1130 = vsyncpa %s1129, 1
    %1131 = vsyncpa [#allocation4], 1
    %s1132 = scalar_lea.sflag [#allocation4], 1
    %1133 = vsyncpa %s1132, 1
    %1134 = vsyncpa [#allocation7], 1
    %s1135 = scalar_lea.sflag [#allocation7], 1
    %1136 = vsyncpa %s1135, 1

</llo_original>
